<compile_context>
chip_gen: v6e
topology: v6e:2x2x1
jax: 0.10.0
libtpu: 0.0.40
codegen_flags: <defaults>
</compile_context>

<pallas_src>
import functools

import numpy as np
import jax
import jax.numpy as jnp
from jax.experimental import pallas as pl
from jax.experimental.pallas import tpu as pltpu

EPS = 1e-5


# ----------------------------- in-kernel helpers -----------------------------
def _fold_lanes(v, c):
    """(1, reps*c) -> (1, c): sum the `reps` channel groups along the lane axis."""
    reps = v.shape[-1] // c
    acc = v[:, :c]
    for r in range(1, reps):
        acc = acc + v[:, r * c:(r + 1) * c]
    return acc


def _bn_relu(y, gamma_lanes, beta_lanes, c, n_elems):
    """Training-mode BatchNorm (batch stats, biased variance, centered two-pass) + ReLU.
    y: (R, reps*c) f32 slab with lane = w*c + channel; gamma/beta: (1, reps*c)."""
    reps = y.shape[-1] // c
    inv_n = 1.0 / float(n_elems)
    s1 = jnp.sum(y, axis=0, keepdims=True)                         # (1, L) per-lane sums
    mean_c = _fold_lanes(s1, c) * inv_n                            # (1, c)
    mean = jnp.tile(mean_c, (1, reps))                             # (1, L)
    yc = y - mean
    var_c = _fold_lanes(jnp.sum(yc * yc, axis=0, keepdims=True), c) * inv_n
    inv_c = jax.lax.rsqrt(var_c + EPS)                             # (1, c)
    scale = jnp.tile(inv_c, (1, reps)) * gamma_lanes               # (1, L)
    return jnp.maximum(yc * scale + beta_lanes, 0.0)


# --------------------------------- the kernel ---------------------------------
def _octconv_kernel(xh_ref, xl_ref, wh_ref, wlow_ref, hpool_ref, wpool_ref,
                    gh_ref, bh_ref, gl_ref, bl_ref,
                    oh_ref, ol_ref,
                    xh_pad, xlow_pad,
                    *, K, p, Coh, Col):
    N, H, WCih = xh_ref.shape            # high-res rows:  (N, H,  W *Cih)
    _, Hl, WlCil = xl_ref.shape          # low-res  rows:  (N, Hl, Wl*Cil)
    WlCih = wpool_ref.shape[-1]          # pooled   rows:  lane width Wl*Cih
    Ho = H + 2 * p - K + 1
    Hlo = Hl + 2 * p - K + 1
    WoCoh = wh_ref.shape[-1]             # Wo  * Coh  (high output lane width, 128 here)
    WloCol = ol_ref.shape[-1]            # Wlo * Col  (low  output lane width)
    Wo = WoCoh // Coh
    Wlo = WloCol // Col

    # ---- high-res input: zero-pad along H (W padding is folded into the weights) ----
    if p > 0:
        zh = jnp.zeros((N, p, WCih), jnp.bfloat16)
        xh_pad[:, :p, :] = zh
        xh_pad[:, p + H:, :] = zh
    xh_pad[:, p:p + H, :] = xh_ref[...]

    # ---- 2x2 average pool of x_h: two tiny constant matmuls (H-pairs, then W-pairs) ----
    xh2d = xh_ref[...].reshape(N * H, WCih)
    hp = jnp.dot(hpool_ref[...], xh2d,
                 preferred_element_type=jnp.float32).astype(jnp.bfloat16)       # (N*Hl, W*Cih)
    pooled = jnp.dot(hp, wpool_ref[...],
                     preferred_element_type=jnp.float32).astype(jnp.bfloat16)   # (N*Hl, Wl*Cih)

    # ---- low-res input: [x_l | pool(x_h)] packed along lanes, zero-padded along H ----
    if p > 0:
        zl = jnp.zeros((N, p, WlCil + WlCih), jnp.bfloat16)
        xlow_pad[:, :p, :] = zl
        xlow_pad[:, p + Hl:, :] = zl
    xlow_pad[:, p:p + Hl, :WlCil] = xl_ref[...]
    xlow_pad[:, p:p + Hl, WlCil:] = pooled.reshape(N, Hl, WlCih)

    # ---- high branch: K row-Toeplitz matmuls -> lane-dense (N*Ho, Wo*Coh) slab ----
    acc_h = jnp.zeros((N * Ho, WoCoh), jnp.float32)
    for kh in range(K):
        lhs = xh_pad[:, kh:kh + Ho, :].reshape(N * Ho, WCih)
        acc_h = acc_h + jnp.dot(lhs, wh_ref[kh], preferred_element_type=jnp.float32)

    # ---- low branch: K matmuls produce [y_l | 2x-W-upsampled L->H] in one slab ----
    acc_lo = jnp.zeros((N * Hlo, WloCol + WoCoh), jnp.float32)
    for kh in range(K):
        lhs = xlow_pad[:, kh:kh + Hlo, :].reshape(N * Hlo, WlCil + WlCih)
        acc_lo = acc_lo + jnp.dot(lhs, wlow_ref[kh], preferred_element_type=jnp.float32)

    y_l = acc_lo[:, :WloCol]                 # conv(x_l,W_ll) + conv(pool(x_h),W_hl)
    y_lh = acc_lo[:, WloCol:]                # conv(x_l,W_lh), already 2x-upsampled along W
    # 2x nearest upsample along H: duplicate each low-res row onto two high-res rows.
    y_lh = y_lh.reshape(N, Hlo, WoCoh)
    y_lh = jnp.broadcast_to(y_lh[:, :, None, :], (N, Hlo, 2, WoCoh)).reshape(N * Ho, WoCoh)
    y_h = acc_h + y_lh

    oh_ref[...] = _bn_relu(y_h, gh_ref[...], bh_ref[...], Coh, N * Ho * Wo)
    ol_ref[...] = _bn_relu(y_l, gl_ref[...], bl_ref[...], Col, N * Hlo * Wlo)


# --------------------------------- wrapper ------------------------------------
def _row_toeplitz(w_hwio, w_in, w_out, pad, out_div=1):
    """(K,K,Cin,Cout) HWIO -> (K, w_in*Cin, w_out*Cout) block-Toeplitz over the W axis.

    Column (wo*Cout + co) of slice kh gets w[kh, kw, ci, co] at row (wi*Cin + ci) with
    wi = (wo // out_div) + kw - pad (skipped when out of range => zero padding).
    out_div=2 additionally folds a 2x nearest W-upsample of the output into the weight."""
    Kh, Kw, Cin, Cout = w_hwio.shape
    sel = np.zeros((Kw, w_in, w_out), np.float32)
    for kw in range(Kw):
        for wo in range(w_out):
            wi = (wo // out_div) + kw - pad
            if 0 <= wi < w_in:
                sel[kw, wi, wo] = 1.0
    t = jnp.einsum("kio,hkcd->hicod", sel, w_hwio.astype(jnp.float32))
    return t.reshape(Kh, w_in * Cin, w_out * Cout).astype(jnp.bfloat16)


def oct_conv_bn_act(x_h_nchw, x_l_nchw, params, *, kernel_size=3, padding=1):
    """Forward pass of OctConvBnAct.  Inputs/outputs are NCHW (PyTorch style)."""
    K, p = kernel_size, padding

    # NCHW -> NHWC -> channels-on-lanes rows (pure layout plumbing, bf16 for the MXU).
    xh = jnp.transpose(x_h_nchw, (0, 2, 3, 1)).astype(jnp.bfloat16)
    xl = jnp.transpose(x_l_nchw, (0, 2, 3, 1)).astype(jnp.bfloat16)
    N, H, W, Cih = xh.shape
    _, Hl, Wl, Cil = xl.shape
    Ho, Wo = H + 2 * p - K + 1, W + 2 * p - K + 1
    Hlo, Wlo = Hl + 2 * p - K + 1, Wl + 2 * p - K + 1
    Coh = params["w_hh"].shape[-1]
    Col = params["w_ll"].shape[-1]
    assert H == 2 * Hl and W == 2 * Wl
    assert Ho == 2 * Hlo and Wo == 2 * Wlo, "2x oct up/down-sampling needs 'same' conv geometry"

    xh_rows = xh.reshape(N, H, W * Cih)
    xl_rows = xl.reshape(N, Hl, Wl * Cil)

    # Row-Toeplitz weights (W-taps + W-padding folded in; L->H also folds the 2x W-upsample).
    w_h = _row_toeplitz(params["w_hh"], W, Wo, p)                        # (K, W*Cih,  Wo*Coh)
    t_ll = _row_toeplitz(params["w_ll"], Wl, Wlo, p)                     # (K, Wl*Cil, Wlo*Col)
    t_hl = _row_toeplitz(params["w_hl"], Wl, Wlo, p)                     # (K, Wl*Cih, Wlo*Col)
    t_lh = _row_toeplitz(params["w_lh"], Wl, Wo, p, out_div=2)           # (K, Wl*Cil, Wo*Coh)
    w_low = jnp.concatenate(
        [jnp.concatenate([t_ll, t_lh], axis=2),
         jnp.concatenate([t_hl, jnp.zeros((K, Wl * Cih, Wo * Coh), t_hl.dtype)], axis=2)],
        axis=1)                                  # (K, Wl*(Cil+Cih), Wlo*Col + Wo*Coh)

    # Constant 2x2 average-pool operators (exact 0.5 entries; block-diagonal over N for H).
    a_h = np.zeros((N * Hl, N * H), np.float32)
    for n in range(N):
        for hl in range(Hl):
            a_h[n * Hl + hl, n * H + 2 * hl] = 0.5
            a_h[n * Hl + hl, n * H + 2 * hl + 1] = 0.5
    p_w = np.zeros((W * Cih, Wl * Cih), np.float32)
    for wl in range(Wl):
        for s in range(2):
            for c in range(Cih):
                p_w[(2 * wl + s) * Cih + c, wl * Cih + c] = 0.5
    a_h = jnp.asarray(a_h, jnp.bfloat16)
    p_w = jnp.asarray(p_w, jnp.bfloat16)

    # BatchNorm affine params, pre-tiled to the lane layout (lane = w*C + c).
    gh = jnp.tile(params["gamma_h"].reshape(1, Coh).astype(jnp.float32), (1, Wo))
    bh = jnp.tile(params["beta_h"].reshape(1, Coh).astype(jnp.float32), (1, Wo))
    gl = jnp.tile(params["gamma_l"].reshape(1, Col).astype(jnp.float32), (1, Wlo))
    bl = jnp.tile(params["beta_l"].reshape(1, Col).astype(jnp.float32), (1, Wlo))

    kern = functools.partial(_octconv_kernel, K=K, p=p, Coh=Coh, Col=Col)
    # No grid / no BlockSpecs: the whole (small) arrays are placed in VMEM once,
    # single-buffered (nothing to pipeline).  Outputs are lane-dense 2-D slabs.
    out_h2d, out_l2d = pl.pallas_call(
        kern,
        out_shape=(jax.ShapeDtypeStruct((N * Ho, Wo * Coh), jnp.float32),
                   jax.ShapeDtypeStruct((N * Hlo, Wlo * Col), jnp.float32)),
        scratch_shapes=[
            pltpu.VMEM((N, H + 2 * p, W * Cih), jnp.bfloat16),            # H-padded x_h rows
            pltpu.VMEM((N, Hl + 2 * p, Wl * (Cil + Cih)), jnp.bfloat16),  # H-padded [x_l|pool]
        ],
        compiler_params=pltpu.CompilerParams(vmem_limit_bytes=32 * 1024 * 1024),
    )(xh_rows, xl_rows, w_h, w_low, a_h, p_w, gh, bh, gl, bl)

    # slab -> NCHW (layout plumbing in the wrapper).
    out_h = jnp.transpose(out_h2d.reshape(N, Ho, Wo, Coh), (0, 3, 1, 2))
    out_l = jnp.transpose(out_l2d.reshape(N, Hlo, Wlo, Col), (0, 3, 1, 2))
    return out_h, out_l


# ------------------------------ pure-JAX reference ----------------------------
def _ref_forward(x_h_nchw, x_l_nchw, params, K, p):
    xh = jnp.transpose(x_h_nchw, (0, 2, 3, 1)).astype(jnp.bfloat16)
    xl = jnp.transpose(x_l_nchw, (0, 2, 3, 1)).astype(jnp.bfloat16)
    dn = ("NHWC", "HWIO", "NHWC")
    conv = lambda x, w: jax.lax.conv_general_dilated(
        x, w.astype(jnp.bfloat16), (1, 1), [(p, p), (p, p)],
        dimension_numbers=dn, preferred_element_type=jnp.float32)

    # 2x2 average pool of x_h (same f32-math / bf16-rounding points as the kernel).
    xh32 = xh.astype(jnp.float32)
    hmean = ((xh32[:, 0::2] + xh32[:, 1::2]) * 0.5).astype(jnp.bfloat16).astype(jnp.float32)
    xh_pool = ((hmean[:, :, 0::2] + hmean[:, :, 1::2]) * 0.5).astype(jnp.bfloat16)

    y_h = conv(xh, params["w_hh"]) + jnp.repeat(
        jnp.repeat(conv(xl, params["w_lh"]), 2, axis=1), 2, axis=2)
    y_l = conv(xl, params["w_ll"]) + conv(xh_pool, params["w_hl"])

    def bn_relu(y, g, b):
        m = y.mean(axis=(0, 1, 2), keepdims=True)
        v = ((y - m) ** 2).mean(axis=(0, 1, 2), keepdims=True)
        yn = (y - m) * jax.lax.rsqrt(v + EPS)
        return jnp.maximum(yn * g.reshape(1, 1, 1, -1) + b.reshape(1, 1, 1, -1), 0.0)

    out_h = bn_relu(y_h, params["gamma_h"], params["beta_h"])
    out_l = bn_relu(y_l, params["gamma_l"], params["beta_l"])
    return (jnp.transpose(out_h, (0, 3, 1, 2)),
            jnp.transpose(out_l, (0, 3, 1, 2)))


# ----------------------------------- main -------------------------------------
if __name__ == "__main__":
    key = jax.random.PRNGKey(0)
    N, Cin, H, W = 2, 8, 16, 16
    Cout, K, alpha, pad = 16, 3, 0.5, 1

    Cil = int(alpha * Cin)
    Cih = Cin - Cil
    Col = int(alpha * Cout)
    Coh = Cout - Col

    k1, k2, k3 = jax.random.split(key, 3)
    x_h = jax.random.normal(k1, (N, Cih, H, W), jnp.float32)
    x_l = jax.random.normal(k2, (N, Cil, H // 2, W // 2), jnp.float32)

    # OctConv2d weight: full (Cout, Cin, K, K) tensor split into the 4 paths (HWIO).
    w_full = jax.random.normal(k3, (Cout, Cin, K, K), jnp.float32) * 0.1
    to_hwio = lambda w: jnp.transpose(w, (2, 3, 1, 0))
    params = dict(
        w_hh=to_hwio(w_full[:Coh, :Cih]),
        w_lh=to_hwio(w_full[:Coh, Cih:]),
        w_hl=to_hwio(w_full[Coh:, :Cih]),
        w_ll=to_hwio(w_full[Coh:, Cih:]),
        # BatchNorm2d PyTorch init: weight=1, bias=0
        gamma_h=jnp.ones((1, Coh), jnp.float32),
        beta_h=jnp.zeros((1, Coh), jnp.float32),
        gamma_l=jnp.ones((1, Col), jnp.float32),
        beta_l=jnp.zeros((1, Col), jnp.float32),
    )

    fwd = jax.jit(functools.partial(oct_conv_bn_act, kernel_size=K, padding=pad))
    out_h, out_l = fwd(x_h, x_l, params)
    jax.block_until_ready((out_h, out_l))

    ref_h, ref_l = _ref_forward(x_h, x_l, params, K, pad)
    assert out_h.shape == (N, Coh, H, W) and out_l.shape == (N, Col, H // 2, W // 2)
    assert jnp.allclose(out_h, ref_h, atol=1e-3, rtol=1e-3)
    assert jnp.allclose(out_l, ref_l, atol=1e-3, rtol=1e-3)
    print("KERNEL_OK")
</pallas_src>

<mosaic_0001>
module attributes {stable_mosaic.version = 11 : i64} {
  func.func @_octconv_kernel(%arg0: memref<2x16x64xbf16, #tpu.memory_space<vmem>>, %arg1: memref<2x8x32xbf16, #tpu.memory_space<vmem>>, %arg2: memref<3x64x128xbf16, #tpu.memory_space<vmem>>, %arg3: memref<3x64x192xbf16, #tpu.memory_space<vmem>>, %arg4: memref<16x32xbf16, #tpu.memory_space<vmem>>, %arg5: memref<64x32xbf16, #tpu.memory_space<vmem>>, %arg6: memref<1x128xf32, #tpu.memory_space<vmem>>, %arg7: memref<1x128xf32, #tpu.memory_space<vmem>>, %arg8: memref<1x64xf32, #tpu.memory_space<vmem>>, %arg9: memref<1x64xf32, #tpu.memory_space<vmem>>, %arg10: memref<32x128xf32, #tpu.memory_space<vmem>>, %arg11: memref<16x64xf32, #tpu.memory_space<vmem>>, %arg12: memref<2x18x64xbf16, #tpu.memory_space<vmem>>, %arg13: memref<2x10x64xbf16, #tpu.memory_space<vmem>>) attributes {dimension_semantics = [], scalar_prefetch = 0 : i64, scratch_operands = 2 : i64, tpu.core_type = #tpu.core_type<tc>} {
    %cst = arith.constant 0.000000e+00 : bf16
    %0 = vector.broadcast %cst : bf16 to vector<2x1x64xbf16>
    %c0 = arith.constant 0 : index
    %c0_0 = arith.constant 0 : index
    %c0_1 = arith.constant 0 : index
    %1 = vector.load %arg12[%c0, %c0_0, %c0_1] : memref<2x18x64xbf16, #tpu.memory_space<vmem>>, vector<2x1x64xbf16>
    tpu.vector_store %arg12[%c0, %c0_0, %c0_1], %0 {strides = array<i32>} : memref<2x18x64xbf16, #tpu.memory_space<vmem>>, vector<2x1x64xbf16>,
    %c0_2 = arith.constant 0 : index
    %c17 = arith.constant 17 : index
    %c0_3 = arith.constant 0 : index
    %2 = vector.load %arg12[%c0_2, %c17, %c0_3] : memref<2x18x64xbf16, #tpu.memory_space<vmem>>, vector<2x1x64xbf16>
    tpu.vector_store %arg12[%c0_2, %c17, %c0_3], %0 {strides = array<i32>} : memref<2x18x64xbf16, #tpu.memory_space<vmem>>, vector<2x1x64xbf16>,
    %c0_4 = arith.constant 0 : index
    %c0_5 = arith.constant 0 : index
    %c0_6 = arith.constant 0 : index
    %3 = vector.load %arg0[%c0_4, %c0_5, %c0_6] : memref<2x16x64xbf16, #tpu.memory_space<vmem>>, vector<2x16x64xbf16>
    %c0_7 = arith.constant 0 : index
    %c1 = arith.constant 1 : index
    %c0_8 = arith.constant 0 : index
    %4 = vector.load %arg12[%c0_7, %c1, %c0_8] : memref<2x18x64xbf16, #tpu.memory_space<vmem>>, vector<2x16x64xbf16>
    tpu.vector_store %arg12[%c0_7, %c1, %c0_8], %3 {strides = array<i32>} : memref<2x18x64xbf16, #tpu.memory_space<vmem>>, vector<2x16x64xbf16>,
    %c0_9 = arith.constant 0 : index
    %c0_10 = arith.constant 0 : index
    %c0_11 = arith.constant 0 : index
    %5 = vector.load %arg0[%c0_9, %c0_10, %c0_11] : memref<2x16x64xbf16, #tpu.memory_space<vmem>>, vector<2x16x64xbf16>
    %6 = vector.shape_cast %5 : vector<2x16x64xbf16> to vector<32x64xbf16>
    %c0_12 = arith.constant 0 : index
    %c0_13 = arith.constant 0 : index
    %7 = vector.load %arg4[%c0_12, %c0_13] : memref<16x32xbf16, #tpu.memory_space<vmem>>, vector<16x32xbf16>
    %cst_14 = arith.constant dense<0.000000e+00> : vector<16x64xf32>
    %8 = tpu.matmul %7, %6, %cst_14 {dimension_numbers = #tpu.dot_dimension_numbers<[1], [0], [0], [1], [0, 0, 1, 1], [], []>} : vector<16x32xbf16>, vector<32x64xbf16>, vector<16x64xf32> -> vector<16x64xf32>
    %9 = arith.truncf %8 : vector<16x64xf32> to vector<16x64xbf16>
    %c0_15 = arith.constant 0 : index
    %c0_16 = arith.constant 0 : index
    %10 = vector.load %arg5[%c0_15, %c0_16] : memref<64x32xbf16, #tpu.memory_space<vmem>>, vector<64x32xbf16>
    %cst_17 = arith.constant dense<0.000000e+00> : vector<16x32xf32>
    %11 = tpu.matmul %9, %10, %cst_17 {dimension_numbers = #tpu.dot_dimension_numbers<[1], [0], [0], [1], [0, 0, 1, 1], [], []>} : vector<16x64xbf16>, vector<64x32xbf16>, vector<16x32xf32> -> vector<16x32xf32>
    %12 = arith.truncf %11 : vector<16x32xf32> to vector<16x32xbf16>
    %cst_18 = arith.constant 0.000000e+00 : bf16
    %13 = vector.broadcast %cst_18 : bf16 to vector<2x1x64xbf16>
    %c0_19 = arith.constant 0 : index
    %c0_20 = arith.constant 0 : index
    %c0_21 = arith.constant 0 : index
    %14 = vector.load %arg13[%c0_19, %c0_20, %c0_21] : memref<2x10x64xbf16, #tpu.memory_space<vmem>>, vector<2x1x64xbf16>
    tpu.vector_store %arg13[%c0_19, %c0_20, %c0_21], %13 {strides = array<i32>} : memref<2x10x64xbf16, #tpu.memory_space<vmem>>, vector<2x1x64xbf16>,
    %c0_22 = arith.constant 0 : index
    %c9 = arith.constant 9 : index
    %c0_23 = arith.constant 0 : index
    %15 = vector.load %arg13[%c0_22, %c9, %c0_23] : memref<2x10x64xbf16, #tpu.memory_space<vmem>>, vector<2x1x64xbf16>
    tpu.vector_store %arg13[%c0_22, %c9, %c0_23], %13 {strides = array<i32>} : memref<2x10x64xbf16, #tpu.memory_space<vmem>>, vector<2x1x64xbf16>,
    %c0_24 = arith.constant 0 : index
    %c0_25 = arith.constant 0 : index
    %c0_26 = arith.constant 0 : index
    %16 = vector.load %arg1[%c0_24, %c0_25, %c0_26] : memref<2x8x32xbf16, #tpu.memory_space<vmem>>, vector<2x8x32xbf16>
    %c0_27 = arith.constant 0 : index
    %c1_28 = arith.constant 1 : index
    %c0_29 = arith.constant 0 : index
    %17 = vector.load %arg13[%c0_27, %c1_28, %c0_29] : memref<2x10x64xbf16, #tpu.memory_space<vmem>>, vector<2x8x32xbf16>
    tpu.vector_store %arg13[%c0_27, %c1_28, %c0_29], %16 {strides = array<i32>} : memref<2x10x64xbf16, #tpu.memory_space<vmem>>, vector<2x8x32xbf16>,
    %18 = vector.shape_cast %12 : vector<16x32xbf16> to vector<2x8x32xbf16>
    %c0_30 = arith.constant 0 : index
    %c1_31 = arith.constant 1 : index
    %c32 = arith.constant 32 : index
    %19 = vector.load %arg13[%c0_30, %c1_31, %c32] : memref<2x10x64xbf16, #tpu.memory_space<vmem>>, vector<2x8x32xbf16>
    tpu.vector_store %arg13[%c0_30, %c1_31, %c32], %18 {strides = array<i32>} : memref<2x10x64xbf16, #tpu.memory_space<vmem>>, vector<2x8x32xbf16>,
    %cst_32 = arith.constant 0.000000e+00 : f32
    %20 = vector.broadcast %cst_32 : f32 to vector<32x128xf32>
    %c0_33 = arith.constant 0 : index
    %c0_34 = arith.constant 0 : index
    %c0_35 = arith.constant 0 : index
    %21 = vector.load %arg12[%c0_33, %c0_34, %c0_35] : memref<2x18x64xbf16, #tpu.memory_space<vmem>>, vector<2x16x64xbf16>
    %22 = vector.shape_cast %21 : vector<2x16x64xbf16> to vector<32x64xbf16>
    %c0_36 = arith.constant 0 : index
    %c0_37 = arith.constant 0 : index
    %c0_38 = arith.constant 0 : index
    %23 = vector.load %arg2[%c0_36, %c0_37, %c0_38] : memref<3x64x128xbf16, #tpu.memory_space<vmem>>, vector<1x64x128xbf16>
    %24 = vector.shape_cast %23 : vector<1x64x128xbf16> to vector<64x128xbf16>
    %cst_39 = arith.constant dense<0.000000e+00> : vector<32x128xf32>
    %25 = tpu.matmul %22, %24, %cst_39 {dimension_numbers = #tpu.dot_dimension_numbers<[1], [0], [0], [1], [0, 0, 1, 1], [], []>} : vector<32x64xbf16>, vector<64x128xbf16>, vector<32x128xf32> -> vector<32x128xf32>
    %26 = arith.addf %20, %25 : vector<32x128xf32>
    %c0_40 = arith.constant 0 : index
    %c1_41 = arith.constant 1 : index
    %c0_42 = arith.constant 0 : index
    %27 = vector.load %arg12[%c0_40, %c1_41, %c0_42] : memref<2x18x64xbf16, #tpu.memory_space<vmem>>, vector<2x16x64xbf16>
    %28 = vector.shape_cast %27 : vector<2x16x64xbf16> to vector<32x64xbf16>
    %c1_43 = arith.constant 1 : index
    %c0_44 = arith.constant 0 : index
    %c0_45 = arith.constant 0 : index
    %29 = vector.load %arg2[%c1_43, %c0_44, %c0_45] : memref<3x64x128xbf16, #tpu.memory_space<vmem>>, vector<1x64x128xbf16>
    %30 = vector.shape_cast %29 : vector<1x64x128xbf16> to vector<64x128xbf16>
    %cst_46 = arith.constant dense<0.000000e+00> : vector<32x128xf32>
    %31 = tpu.matmul %28, %30, %cst_46 {dimension_numbers = #tpu.dot_dimension_numbers<[1], [0], [0], [1], [0, 0, 1, 1], [], []>} : vector<32x64xbf16>, vector<64x128xbf16>, vector<32x128xf32> -> vector<32x128xf32>
    %32 = arith.addf %26, %31 : vector<32x128xf32>
    %c0_47 = arith.constant 0 : index
    %c2 = arith.constant 2 : index
    %c0_48 = arith.constant 0 : index
    %33 = vector.load %arg12[%c0_47, %c2, %c0_48] : memref<2x18x64xbf16, #tpu.memory_space<vmem>>, vector<2x16x64xbf16>
    %34 = vector.shape_cast %33 : vector<2x16x64xbf16> to vector<32x64xbf16>
    %c2_49 = arith.constant 2 : index
    %c0_50 = arith.constant 0 : index
    %c0_51 = arith.constant 0 : index
    %35 = vector.load %arg2[%c2_49, %c0_50, %c0_51] : memref<3x64x128xbf16, #tpu.memory_space<vmem>>, vector<1x64x128xbf16>
    %36 = vector.shape_cast %35 : vector<1x64x128xbf16> to vector<64x128xbf16>
    %cst_52 = arith.constant dense<0.000000e+00> : vector<32x128xf32>
    %37 = tpu.matmul %34, %36, %cst_52 {dimension_numbers = #tpu.dot_dimension_numbers<[1], [0], [0], [1], [0, 0, 1, 1], [], []>} : vector<32x64xbf16>, vector<64x128xbf16>, vector<32x128xf32> -> vector<32x128xf32>
    %38 = arith.addf %32, %37 : vector<32x128xf32>
    %cst_53 = arith.constant 0.000000e+00 : f32
    %39 = vector.broadcast %cst_53 : f32 to vector<16x192xf32>
    %c0_54 = arith.constant 0 : index
    %c0_55 = arith.constant 0 : index
    %c0_56 = arith.constant 0 : index
    %40 = vector.load %arg13[%c0_54, %c0_55, %c0_56] : memref<2x10x64xbf16, #tpu.memory_space<vmem>>, vector<2x8x64xbf16>
    %41 = vector.shape_cast %40 : vector<2x8x64xbf16> to vector<16x64xbf16>
    %c0_57 = arith.constant 0 : index
    %c0_58 = arith.constant 0 : index
    %c0_59 = arith.constant 0 : index
    %42 = vector.load %arg3[%c0_57, %c0_58, %c0_59] : memref<3x64x192xbf16, #tpu.memory_space<vmem>>, vector<1x64x192xbf16>
    %43 = vector.shape_cast %42 : vector<1x64x192xbf16> to vector<64x192xbf16>
    %cst_60 = arith.constant dense<0.000000e+00> : vector<16x192xf32>
    %44 = tpu.matmul %41, %43, %cst_60 {dimension_numbers = #tpu.dot_dimension_numbers<[1], [0], [0], [1], [0, 0, 1, 1], [], []>} : vector<16x64xbf16>, vector<64x192xbf16>, vector<16x192xf32> -> vector<16x192xf32>
    %45 = arith.addf %39, %44 : vector<16x192xf32>
    %c0_61 = arith.constant 0 : index
    %c1_62 = arith.constant 1 : index
    %c0_63 = arith.constant 0 : index
    %46 = vector.load %arg13[%c0_61, %c1_62, %c0_63] : memref<2x10x64xbf16, #tpu.memory_space<vmem>>, vector<2x8x64xbf16>
    %47 = vector.shape_cast %46 : vector<2x8x64xbf16> to vector<16x64xbf16>
    %c1_64 = arith.constant 1 : index
    %c0_65 = arith.constant 0 : index
    %c0_66 = arith.constant 0 : index
    %48 = vector.load %arg3[%c1_64, %c0_65, %c0_66] : memref<3x64x192xbf16, #tpu.memory_space<vmem>>, vector<1x64x192xbf16>
    %49 = vector.shape_cast %48 : vector<1x64x192xbf16> to vector<64x192xbf16>
    %cst_67 = arith.constant dense<0.000000e+00> : vector<16x192xf32>
    %50 = tpu.matmul %47, %49, %cst_67 {dimension_numbers = #tpu.dot_dimension_numbers<[1], [0], [0], [1], [0, 0, 1, 1], [], []>} : vector<16x64xbf16>, vector<64x192xbf16>, vector<16x192xf32> -> vector<16x192xf32>
    %51 = arith.addf %45, %50 : vector<16x192xf32>
    %c0_68 = arith.constant 0 : index
    %c2_69 = arith.constant 2 : index
    %c0_70 = arith.constant 0 : index
    %52 = vector.load %arg13[%c0_68, %c2_69, %c0_70] : memref<2x10x64xbf16, #tpu.memory_space<vmem>>, vector<2x8x64xbf16>
    %53 = vector.shape_cast %52 : vector<2x8x64xbf16> to vector<16x64xbf16>
    %c2_71 = arith.constant 2 : index
    %c0_72 = arith.constant 0 : index
    %c0_73 = arith.constant 0 : index
    %54 = vector.load %arg3[%c2_71, %c0_72, %c0_73] : memref<3x64x192xbf16, #tpu.memory_space<vmem>>, vector<1x64x192xbf16>
    %55 = vector.shape_cast %54 : vector<1x64x192xbf16> to vector<64x192xbf16>
    %cst_74 = arith.constant dense<0.000000e+00> : vector<16x192xf32>
    %56 = tpu.matmul %53, %55, %cst_74 {dimension_numbers = #tpu.dot_dimension_numbers<[1], [0], [0], [1], [0, 0, 1, 1], [], []>} : vector<16x64xbf16>, vector<64x192xbf16>, vector<16x192xf32> -> vector<16x192xf32>
    %57 = arith.addf %51, %56 : vector<16x192xf32>
    %58 = vector.extract_strided_slice %57 {offsets = [0, 0], sizes = [16, 64], strides = [1, 1]} : vector<16x192xf32> to vector<16x64xf32>
    %59 = vector.extract_strided_slice %57 {offsets = [0, 64], sizes = [16, 128], strides = [1, 1]} : vector<16x192xf32> to vector<16x128xf32>
    %60 = vector.shape_cast %59 : vector<16x128xf32> to vector<2x8x128xf32>
    %61 = vector.shape_cast %60 : vector<2x8x128xf32> to vector<2x8x1x128xf32>
    %62 = vector.shape_cast %61 : vector<2x8x1x128xf32> to vector<2x8x1x128xf32>
    %63 = vector.broadcast %62 : vector<2x8x1x128xf32> to vector<2x8x2x128xf32>
    %64 = vector.shape_cast %63 : vector<2x8x2x128xf32> to vector<32x128xf32>
    %65 = arith.addf %38, %64 : vector<32x128xf32>
    %c0_75 = arith.constant 0 : index
    %c0_76 = arith.constant 0 : index
    %66 = vector.load %arg6[%c0_75, %c0_76] : memref<1x128xf32, #tpu.memory_space<vmem>>, vector<1x128xf32>
    %c0_77 = arith.constant 0 : index
    %c0_78 = arith.constant 0 : index
    %67 = vector.load %arg7[%c0_77, %c0_78] : memref<1x128xf32, #tpu.memory_space<vmem>>, vector<1x128xf32>
    %cst_79 = arith.constant dense<0.000000e+00> : vector<128xf32>
    %68 = vector.multi_reduction <add>, %65, %cst_79 [0] : vector<32x128xf32> to vector<128xf32>
    %69 = vector.shape_cast %68 : vector<128xf32> to vector<1x128xf32>
    %70 = vector.extract_strided_slice %69 {offsets = [0, 0], sizes = [1, 8], strides = [1, 1]} : vector<1x128xf32> to vector<1x8xf32>
    %71 = vector.extract_strided_slice %69 {offsets = [0, 8], sizes = [1, 8], strides = [1, 1]} : vector<1x128xf32> to vector<1x8xf32>
    %72 = arith.addf %70, %71 : vector<1x8xf32>
    %73 = vector.extract_strided_slice %69 {offsets = [0, 16], sizes = [1, 8], strides = [1, 1]} : vector<1x128xf32> to vector<1x8xf32>
    %74 = arith.addf %72, %73 : vector<1x8xf32>
    %75 = vector.extract_strided_slice %69 {offsets = [0, 24], sizes = [1, 8], strides = [1, 1]} : vector<1x128xf32> to vector<1x8xf32>
    %76 = arith.addf %74, %75 : vector<1x8xf32>
    %77 = vector.extract_strided_slice %69 {offsets = [0, 32], sizes = [1, 8], strides = [1, 1]} : vector<1x128xf32> to vector<1x8xf32>
    %78 = arith.addf %76, %77 : vector<1x8xf32>
    %79 = vector.extract_strided_slice %69 {offsets = [0, 40], sizes = [1, 8], strides = [1, 1]} : vector<1x128xf32> to vector<1x8xf32>
    %80 = arith.addf %78, %79 : vector<1x8xf32>
    %81 = vector.extract_strided_slice %69 {offsets = [0, 48], sizes = [1, 8], strides = [1, 1]} : vector<1x128xf32> to vector<1x8xf32>
    %82 = arith.addf %80, %81 : vector<1x8xf32>
    %83 = vector.extract_strided_slice %69 {offsets = [0, 56], sizes = [1, 8], strides = [1, 1]} : vector<1x128xf32> to vector<1x8xf32>
    %84 = arith.addf %82, %83 : vector<1x8xf32>
    %85 = vector.extract_strided_slice %69 {offsets = [0, 64], sizes = [1, 8], strides = [1, 1]} : vector<1x128xf32> to vector<1x8xf32>
    %86 = arith.addf %84, %85 : vector<1x8xf32>
    %87 = vector.extract_strided_slice %69 {offsets = [0, 72], sizes = [1, 8], strides = [1, 1]} : vector<1x128xf32> to vector<1x8xf32>
    %88 = arith.addf %86, %87 : vector<1x8xf32>
    %89 = vector.extract_strided_slice %69 {offsets = [0, 80], sizes = [1, 8], strides = [1, 1]} : vector<1x128xf32> to vector<1x8xf32>
    %90 = arith.addf %88, %89 : vector<1x8xf32>
    %91 = vector.extract_strided_slice %69 {offsets = [0, 88], sizes = [1, 8], strides = [1, 1]} : vector<1x128xf32> to vector<1x8xf32>
    %92 = arith.addf %90, %91 : vector<1x8xf32>
    %93 = vector.extract_strided_slice %69 {offsets = [0, 96], sizes = [1, 8], strides = [1, 1]} : vector<1x128xf32> to vector<1x8xf32>
    %94 = arith.addf %92, %93 : vector<1x8xf32>
    %95 = vector.extract_strided_slice %69 {offsets = [0, 104], sizes = [1, 8], strides = [1, 1]} : vector<1x128xf32> to vector<1x8xf32>
    %96 = arith.addf %94, %95 : vector<1x8xf32>
    %97 = vector.extract_strided_slice %69 {offsets = [0, 112], sizes = [1, 8], strides = [1, 1]} : vector<1x128xf32> to vector<1x8xf32>
    %98 = arith.addf %96, %97 : vector<1x8xf32>
    %99 = vector.extract_strided_slice %69 {offsets = [0, 120], sizes = [1, 8], strides = [1, 1]} : vector<1x128xf32> to vector<1x8xf32>
    %100 = arith.addf %98, %99 : vector<1x8xf32>
    %cst_80 = arith.constant 0.001953125 : f32
    %101 = vector.broadcast %cst_80 : f32 to vector<1x8xf32>
    %102 = arith.mulf %100, %101 : vector<1x8xf32>
    %103 = tpu.concatenate %102, %102, %102, %102, %102, %102, %102, %102, %102, %102, %102, %102, %102, %102, %102, %102 in 1 : vector<1x8xf32>, vector<1x8xf32>, vector<1x8xf32>, vector<1x8xf32>, vector<1x8xf32>, vector<1x8xf32>, vector<1x8xf32>, vector<1x8xf32>, vector<1x8xf32>, vector<1x8xf32>, vector<1x8xf32>, vector<1x8xf32>, vector<1x8xf32>, vector<1x8xf32>, vector<1x8xf32>, vector<1x8xf32> -> vector<1x128xf32>
    %104 = vector.broadcast %103 : vector<1x128xf32> to vector<32x128xf32>
    %105 = arith.subf %65, %104 : vector<32x128xf32>
    %106 = arith.mulf %105, %105 : vector<32x128xf32>
    %cst_81 = arith.constant dense<0.000000e+00> : vector<128xf32>
    %107 = vector.multi_reduction <add>, %106, %cst_81 [0] : vector<32x128xf32> to vector<128xf32>
    %108 = vector.shape_cast %107 : vector<128xf32> to vector<1x128xf32>
    %109 = vector.extract_strided_slice %108 {offsets = [0, 0], sizes = [1, 8], strides = [1, 1]} : vector<1x128xf32> to vector<1x8xf32>
    %110 = vector.extract_strided_slice %108 {offsets = [0, 8], sizes = [1, 8], strides = [1, 1]} : vector<1x128xf32> to vector<1x8xf32>
    %111 = arith.addf %109, %110 : vector<1x8xf32>
    %112 = vector.extract_strided_slice %108 {offsets = [0, 16], sizes = [1, 8], strides = [1, 1]} : vector<1x128xf32> to vector<1x8xf32>
    %113 = arith.addf %111, %112 : vector<1x8xf32>
    %114 = vector.extract_strided_slice %108 {offsets = [0, 24], sizes = [1, 8], strides = [1, 1]} : vector<1x128xf32> to vector<1x8xf32>
    %115 = arith.addf %113, %114 : vector<1x8xf32>
    %116 = vector.extract_strided_slice %108 {offsets = [0, 32], sizes = [1, 8], strides = [1, 1]} : vector<1x128xf32> to vector<1x8xf32>
    %117 = arith.addf %115, %116 : vector<1x8xf32>
    %118 = vector.extract_strided_slice %108 {offsets = [0, 40], sizes = [1, 8], strides = [1, 1]} : vector<1x128xf32> to vector<1x8xf32>
    %119 = arith.addf %117, %118 : vector<1x8xf32>
    %120 = vector.extract_strided_slice %108 {offsets = [0, 48], sizes = [1, 8], strides = [1, 1]} : vector<1x128xf32> to vector<1x8xf32>
    %121 = arith.addf %119, %120 : vector<1x8xf32>
    %122 = vector.extract_strided_slice %108 {offsets = [0, 56], sizes = [1, 8], strides = [1, 1]} : vector<1x128xf32> to vector<1x8xf32>
    %123 = arith.addf %121, %122 : vector<1x8xf32>
    %124 = vector.extract_strided_slice %108 {offsets = [0, 64], sizes = [1, 8], strides = [1, 1]} : vector<1x128xf32> to vector<1x8xf32>
    %125 = arith.addf %123, %124 : vector<1x8xf32>
    %126 = vector.extract_strided_slice %108 {offsets = [0, 72], sizes = [1, 8], strides = [1, 1]} : vector<1x128xf32> to vector<1x8xf32>
    %127 = arith.addf %125, %126 : vector<1x8xf32>
    %128 = vector.extract_strided_slice %108 {offsets = [0, 80], sizes = [1, 8], strides = [1, 1]} : vector<1x128xf32> to vector<1x8xf32>
    %129 = arith.addf %127, %128 : vector<1x8xf32>
    %130 = vector.extract_strided_slice %108 {offsets = [0, 88], sizes = [1, 8], strides = [1, 1]} : vector<1x128xf32> to vector<1x8xf32>
    %131 = arith.addf %129, %130 : vector<1x8xf32>
    %132 = vector.extract_strided_slice %108 {offsets = [0, 96], sizes = [1, 8], strides = [1, 1]} : vector<1x128xf32> to vector<1x8xf32>
    %133 = arith.addf %131, %132 : vector<1x8xf32>
    %134 = vector.extract_strided_slice %108 {offsets = [0, 104], sizes = [1, 8], strides = [1, 1]} : vector<1x128xf32> to vector<1x8xf32>
    %135 = arith.addf %133, %134 : vector<1x8xf32>
    %136 = vector.extract_strided_slice %108 {offsets = [0, 112], sizes = [1, 8], strides = [1, 1]} : vector<1x128xf32> to vector<1x8xf32>
    %137 = arith.addf %135, %136 : vector<1x8xf32>
    %138 = vector.extract_strided_slice %108 {offsets = [0, 120], sizes = [1, 8], strides = [1, 1]} : vector<1x128xf32> to vector<1x8xf32>
    %139 = arith.addf %137, %138 : vector<1x8xf32>
    %cst_82 = arith.constant 0.001953125 : f32
    %140 = vector.broadcast %cst_82 : f32 to vector<1x8xf32>
    %141 = arith.mulf %139, %140 : vector<1x8xf32>
    %cst_83 = arith.constant 9.99999974E-6 : f32
    %142 = vector.broadcast %cst_83 : f32 to vector<1x8xf32>
    %143 = arith.addf %141, %142 : vector<1x8xf32>
    %144 = math.rsqrt %143 : vector<1x8xf32>
    %145 = tpu.concatenate %144, %144, %144, %144, %144, %144, %144, %144, %144, %144, %144, %144, %144, %144, %144, %144 in 1 : vector<1x8xf32>, vector<1x8xf32>, vector<1x8xf32>, vector<1x8xf32>, vector<1x8xf32>, vector<1x8xf32>, vector<1x8xf32>, vector<1x8xf32>, vector<1x8xf32>, vector<1x8xf32>, vector<1x8xf32>, vector<1x8xf32>, vector<1x8xf32>, vector<1x8xf32>, vector<1x8xf32>, vector<1x8xf32> -> vector<1x128xf32>
    %146 = arith.mulf %145, %66 : vector<1x128xf32>
    %147 = vector.broadcast %146 : vector<1x128xf32> to vector<32x128xf32>
    %148 = arith.mulf %105, %147 : vector<32x128xf32>
    %149 = vector.broadcast %67 : vector<1x128xf32> to vector<32x128xf32>
    %150 = arith.addf %148, %149 : vector<32x128xf32>
    %cst_84 = arith.constant 0.000000e+00 : f32
    %151 = vector.broadcast %cst_84 : f32 to vector<32x128xf32>
    %152 = arith.maximumf %150, %151 : vector<32x128xf32>
    %c0_85 = arith.constant 0 : index
    %c0_86 = arith.constant 0 : index
    %153 = vector.load %arg10[%c0_85, %c0_86] : memref<32x128xf32, #tpu.memory_space<vmem>>, vector<32x128xf32>
    tpu.vector_store %arg10[%c0_85, %c0_86], %152 {strides = array<i32>} : memref<32x128xf32, #tpu.memory_space<vmem>>, vector<32x128xf32>,
    %c0_87 = arith.constant 0 : index
    %c0_88 = arith.constant 0 : index
    %154 = vector.load %arg8[%c0_87, %c0_88] : memref<1x64xf32, #tpu.memory_space<vmem>>, vector<1x64xf32>
    %c0_89 = arith.constant 0 : index
    %c0_90 = arith.constant 0 : index
    %155 = vector.load %arg9[%c0_89, %c0_90] : memref<1x64xf32, #tpu.memory_space<vmem>>, vector<1x64xf32>
    %cst_91 = arith.constant dense<0.000000e+00> : vector<64xf32>
    %156 = vector.multi_reduction <add>, %58, %cst_91 [0] : vector<16x64xf32> to vector<64xf32>
    %157 = vector.shape_cast %156 : vector<64xf32> to vector<1x64xf32>
    %158 = vector.extract_strided_slice %157 {offsets = [0, 0], sizes = [1, 8], strides = [1, 1]} : vector<1x64xf32> to vector<1x8xf32>
    %159 = vector.extract_strided_slice %157 {offsets = [0, 8], sizes = [1, 8], strides = [1, 1]} : vector<1x64xf32> to vector<1x8xf32>
    %160 = arith.addf %158, %159 : vector<1x8xf32>
    %161 = vector.extract_strided_slice %157 {offsets = [0, 16], sizes = [1, 8], strides = [1, 1]} : vector<1x64xf32> to vector<1x8xf32>
    %162 = arith.addf %160, %161 : vector<1x8xf32>
    %163 = vector.extract_strided_slice %157 {offsets = [0, 24], sizes = [1, 8], strides = [1, 1]} : vector<1x64xf32> to vector<1x8xf32>
    %164 = arith.addf %162, %163 : vector<1x8xf32>
    %165 = vector.extract_strided_slice %157 {offsets = [0, 32], sizes = [1, 8], strides = [1, 1]} : vector<1x64xf32> to vector<1x8xf32>
    %166 = arith.addf %164, %165 : vector<1x8xf32>
    %167 = vector.extract_strided_slice %157 {offsets = [0, 40], sizes = [1, 8], strides = [1, 1]} : vector<1x64xf32> to vector<1x8xf32>
    %168 = arith.addf %166, %167 : vector<1x8xf32>
    %169 = vector.extract_strided_slice %157 {offsets = [0, 48], sizes = [1, 8], strides = [1, 1]} : vector<1x64xf32> to vector<1x8xf32>
    %170 = arith.addf %168, %169 : vector<1x8xf32>
    %171 = vector.extract_strided_slice %157 {offsets = [0, 56], sizes = [1, 8], strides = [1, 1]} : vector<1x64xf32> to vector<1x8xf32>
    %172 = arith.addf %170, %171 : vector<1x8xf32>
    %cst_92 = arith.constant 7.812500e-03 : f32
    %173 = vector.broadcast %cst_92 : f32 to vector<1x8xf32>
    %174 = arith.mulf %172, %173 : vector<1x8xf32>
    %175 = tpu.concatenate %174, %174, %174, %174, %174, %174, %174, %174 in 1 : vector<1x8xf32>, vector<1x8xf32>, vector<1x8xf32>, vector<1x8xf32>, vector<1x8xf32>, vector<1x8xf32>, vector<1x8xf32>, vector<1x8xf32> -> vector<1x64xf32>
    %176 = vector.broadcast %175 : vector<1x64xf32> to vector<16x64xf32>
    %177 = arith.subf %58, %176 : vector<16x64xf32>
    %178 = arith.mulf %177, %177 : vector<16x64xf32>
    %cst_93 = arith.constant dense<0.000000e+00> : vector<64xf32>
    %179 = vector.multi_reduction <add>, %178, %cst_93 [0] : vector<16x64xf32> to vector<64xf32>
    %180 = vector.shape_cast %179 : vector<64xf32> to vector<1x64xf32>
    %181 = vector.extract_strided_slice %180 {offsets = [0, 0], sizes = [1, 8], strides = [1, 1]} : vector<1x64xf32> to vector<1x8xf32>
    %182 = vector.extract_strided_slice %180 {offsets = [0, 8], sizes = [1, 8], strides = [1, 1]} : vector<1x64xf32> to vector<1x8xf32>
    %183 = arith.addf %181, %182 : vector<1x8xf32>
    %184 = vector.extract_strided_slice %180 {offsets = [0, 16], sizes = [1, 8], strides = [1, 1]} : vector<1x64xf32> to vector<1x8xf32>
    %185 = arith.addf %183, %184 : vector<1x8xf32>
    %186 = vector.extract_strided_slice %180 {offsets = [0, 24], sizes = [1, 8], strides = [1, 1]} : vector<1x64xf32> to vector<1x8xf32>
    %187 = arith.addf %185, %186 : vector<1x8xf32>
    %188 = vector.extract_strided_slice %180 {offsets = [0, 32], sizes = [1, 8], strides = [1, 1]} : vector<1x64xf32> to vector<1x8xf32>
    %189 = arith.addf %187, %188 : vector<1x8xf32>
    %190 = vector.extract_strided_slice %180 {offsets = [0, 40], sizes = [1, 8], strides = [1, 1]} : vector<1x64xf32> to vector<1x8xf32>
    %191 = arith.addf %189, %190 : vector<1x8xf32>
    %192 = vector.extract_strided_slice %180 {offsets = [0, 48], sizes = [1, 8], strides = [1, 1]} : vector<1x64xf32> to vector<1x8xf32>
    %193 = arith.addf %191, %192 : vector<1x8xf32>
    %194 = vector.extract_strided_slice %180 {offsets = [0, 56], sizes = [1, 8], strides = [1, 1]} : vector<1x64xf32> to vector<1x8xf32>
    %195 = arith.addf %193, %194 : vector<1x8xf32>
    %cst_94 = arith.constant 7.812500e-03 : f32
    %196 = vector.broadcast %cst_94 : f32 to vector<1x8xf32>
    %197 = arith.mulf %195, %196 : vector<1x8xf32>
    %cst_95 = arith.constant 9.99999974E-6 : f32
    %198 = vector.broadcast %cst_95 : f32 to vector<1x8xf32>
    %199 = arith.addf %197, %198 : vector<1x8xf32>
    %200 = math.rsqrt %199 : vector<1x8xf32>
    %201 = tpu.concatenate %200, %200, %200, %200, %200, %200, %200, %200 in 1 : vector<1x8xf32>, vector<1x8xf32>, vector<1x8xf32>, vector<1x8xf32>, vector<1x8xf32>, vector<1x8xf32>, vector<1x8xf32>, vector<1x8xf32> -> vector<1x64xf32>
    %202 = arith.mulf %201, %154 : vector<1x64xf32>
    %203 = vector.broadcast %202 : vector<1x64xf32> to vector<16x64xf32>
    %204 = arith.mulf %177, %203 : vector<16x64xf32>
    %205 = vector.broadcast %155 : vector<1x64xf32> to vector<16x64xf32>
    %206 = arith.addf %204, %205 : vector<16x64xf32>
    %cst_96 = arith.constant 0.000000e+00 : f32
    %207 = vector.broadcast %cst_96 : f32 to vector<16x64xf32>
    %208 = arith.maximumf %206, %207 : vector<16x64xf32>
    %c0_97 = arith.constant 0 : index
    %c0_98 = arith.constant 0 : index
    %209 = vector.load %arg11[%c0_97, %c0_98] : memref<16x64xf32, #tpu.memory_space<vmem>>, vector<16x64xf32>
    tpu.vector_store %arg11[%c0_97, %c0_98], %208 {strides = array<i32>} : memref<16x64xf32, #tpu.memory_space<vmem>>, vector<16x64xf32>,
    return
  }
}

</mosaic_0001>

<llo_original>
// kernel: oct_conv_bn_act.1
$region0: #{oct_conv_bn_act.1}
  #allocation0 [shape = 'u32[]', space=smem, size = 0x4, offset = 0x4, fixed_abs, tag = 'smem constant byte address 0x4 - core index']
  #allocation1 [shape = 'u32[144,128]{1,0:T(1,128)}', space=vmem, size = 0x12000, scoped, tag = 'internal scratch']
  #allocation2 [shape = 'bf16[2,18,64]{2,1,0:T(8,128)(2,1)}', space=vmem, size = 0x3000, scoped, tag = 'scratch operand']
  #allocation3 [shape = 'bf16[2,10,64]{2,1,0:T(8,128)(2,1)}', space=vmem, size = 0x2000, scoped, tag = 'scratch operand']
  %s0 = inlined_call_operand.vmem [shape: bf16[2,16,64], index: 0, kind: input, shape index: {}]
  %s1 = inlined_call_operand.vmem [shape: bf16[2,8,32], index: 1, kind: input, shape index: {}]
  %s2 = inlined_call_operand.vmem [shape: bf16[3,64,128], index: 2, kind: input, shape index: {}]
  %s3 = inlined_call_operand.vmem [shape: bf16[3,64,192], index: 3, kind: input, shape index: {}]
  %s4 = inlined_call_operand.vmem [shape: bf16[16,32], index: 4, kind: input, shape index: {}]
  %s5 = inlined_call_operand.vmem [shape: bf16[64,32], index: 5, kind: input, shape index: {}]
  %s6 = inlined_call_operand.vmem [shape: f32[1,128], index: 6, kind: input, shape index: {}]
  %s7 = inlined_call_operand.vmem [shape: f32[1,128], index: 7, kind: input, shape index: {}]
  %s8 = inlined_call_operand.vmem [shape: f32[1,64], index: 8, kind: input, shape index: {}]
  %s9 = inlined_call_operand.vmem [shape: f32[1,64], index: 9, kind: input, shape index: {}]
  %s10 = inlined_call_operand.vmem [shape: f32[32,128], index: 10, kind: output, shape index: {0}]
  %s11 = inlined_call_operand.vmem [shape: f32[16,64], index: 11, kind: output, shape index: {1}]
  %12 = xla_tuple %s10, %s11
  %s13 = sld [smem:[#allocation0]]
  $region58: #{oct_conv_bn_act.1} parent=0
    _
  %s15 = ssub.s32 1, %s13
  %s16 = scalar_select 0, %s15, %s13
  // Predicated region
  $region2: #{oct_conv_bn_act.1} parent=0 // pred_check
    _
  $region3: #{oct_conv_bn_act.1} parent=0 // pred_check_branch
    %18 = sbr.rel (0) target = $region5
  $region4: #{oct_conv_bn_act.1} parent=0 // pred_region
    _
  $region5: #{oct_conv_bn_act.1} parent=0 // pred_fallthru
    _
  // Predicated region
  $region6: #{oct_conv_bn_act.1} parent=0 // pred_check
    _
  $region7: #{oct_conv_bn_act.1} parent=0 // pred_check_branch
    %20 = sbr.rel (0) target = $region9
  $region8: #{oct_conv_bn_act.1} parent=0 // pred_region
    _
  $region9: #{oct_conv_bn_act.1} parent=0 // pred_fallthru
    _
  // Predicated region
  $region10: #{oct_conv_bn_act.1} parent=0 // pred_check
    _
  $region11: #{oct_conv_bn_act.1} parent=0 // pred_check_branch
    %22 = sbr.rel (0) target = $region13
  $region12: #{oct_conv_bn_act.1} parent=0 // pred_region
    _
  $region13: #{oct_conv_bn_act.1} parent=0 // pred_fallthru
    _
  // Predicated region
  $region14: #{oct_conv_bn_act.1} parent=0 // pred_check
    _
  $region15: #{oct_conv_bn_act.1} parent=0 // pred_check_branch
    %24 = sbr.rel (0) target = $region17
  $region16: #{oct_conv_bn_act.1} parent=0 // pred_region
    _
  $region17: #{oct_conv_bn_act.1} parent=0 // pred_fallthru
    _
  // Predicated region
  $region18: #{oct_conv_bn_act.1} parent=0 // pred_check
    _
  $region19: #{oct_conv_bn_act.1} parent=0 // pred_check_branch
    %26 = sbr.rel (0) target = $region21
  $region20: #{oct_conv_bn_act.1} parent=0 // pred_region
    _
  $region21: #{oct_conv_bn_act.1} parent=0 // pred_fallthru
    _
  // Predicated region
  $region22: #{oct_conv_bn_act.1} parent=0 // pred_check
    _
  $region23: #{oct_conv_bn_act.1} parent=0 // pred_check_branch
    %28 = sbr.rel (0) target = $region25
  $region24: #{oct_conv_bn_act.1} parent=0 // pred_region
    _
  $region25: #{oct_conv_bn_act.1} parent=0 // pred_fallthru
    _
  // Predicated region
  $region26: #{oct_conv_bn_act.1} parent=0 // pred_check
    _
  $region27: #{oct_conv_bn_act.1} parent=0 // pred_check_branch
    %30 = sbr.rel (0) target = $region29
  $region28: #{oct_conv_bn_act.1} parent=0 // pred_region
    _
  $region29: #{oct_conv_bn_act.1} parent=0 // pred_fallthru
    _
  // Predicated region
  $region30: #{oct_conv_bn_act.1} parent=0 // pred_check
    _
  $region31: #{oct_conv_bn_act.1} parent=0 // pred_check_branch
    %32 = sbr.rel (0) target = $region33
  $region32: #{oct_conv_bn_act.1} parent=0 // pred_region
    _
  $region33: #{oct_conv_bn_act.1} parent=0 // pred_fallthru
    _
  // Predicated region
  $region34: #{oct_conv_bn_act.1} parent=0 // pred_check
    _
  $region35: #{oct_conv_bn_act.1} parent=0 // pred_check_branch
    %34 = sbr.rel (0) target = $region37
  $region36: #{oct_conv_bn_act.1} parent=0 // pred_region
    _
  $region37: #{oct_conv_bn_act.1} parent=0 // pred_fallthru
    _
  // Predicated region
  $region38: #{oct_conv_bn_act.1} parent=0 // pred_check
    _
  $region39: #{oct_conv_bn_act.1} parent=0 // pred_check_branch
    %36 = sbr.rel (0) target = $region41
  $region40: #{oct_conv_bn_act.1} parent=0 // pred_region
    _
  $region41: #{oct_conv_bn_act.1} parent=0 // pred_fallthru
    _
  %vm38 = vcmask 516096
  %vm39 = vsmask.f32 256
  %vm40 = vmand %vm38, %vm39
  %v41 = vld [vmem:[#allocation2] sm:$0x1]
  %v42 = vsel %vm40, 0, %v41
  %43 = vst [vmem:[#allocation2] sm:$0x1] %v42
  %v44 = vld [vmem:[#allocation2 + $0xc] sm:$0x1]
  %v45 = vsel %vm40, 0, %v44
  %46 = vst [vmem:[#allocation2 + $0xc] sm:$0x1] %v45
  %vm47 = vsmask.f32 7938
  %vm48 = vmand %vm38, %vm47
  %v49 = vld [vmem:[#allocation2 + $0x8] sm:$0x1]
  %v50 = vsel %vm48, 0, %v49
  %51 = vst [vmem:[#allocation2 + $0x8] sm:$0x1] %v50
  %v52 = vld [vmem:[#allocation2 + $0x14] sm:$0x1]
  %v53 = vsel %vm48, 0, %v52
  %54 = vst [vmem:[#allocation2 + $0x14] sm:$0x1] %v53
  %v55 = vld [vmem:[%s0] sm:$0xf]
  %v56 = vld [vmem:[%s0 + $0x4] sm:$0xf]
  %v57 = vld [vmem:[%s0 + $0x8] sm:$0xf]
  %v58 = vld [vmem:[%s0 + $0xc] sm:$0xf]
  %vm59 = vsmask.f32 4368
  %vm60 = vmor %vm39, %vm59
  %v62 = vshrl.u32 %v55, 16
  %v64 = vrot.slane %v62, 7
  %v65 = vshll.u32 %v55, 16
  %v67 = vor.u32 %v64, %v65
  %v68 = vrot.slane %v64, 4
  %v70 = vshrl.u32 %v56, 16
  %v72 = vrot.slane %v70, 7
  %v73 = vshll.u32 %v56, 16
  %v75 = vor.u32 %v72, %v73
  %v76 = vsel %vm60, %v68, %v75
  %v77 = vrot.slane %v72, 4
  %v79 = vshrl.u32 %v57, 16
  %v81 = vrot.slane %v79, 7
  %v82 = vshll.u32 %v57, 16
  %v84 = vor.u32 %v81, %v82
  %v85 = vrot.slane %v81, 4
  %v87 = vshrl.u32 %v58, 16
  %v89 = vrot.slane %v87, 7
  %v90 = vshll.u32 %v58, 16
  %v92 = vor.u32 %v89, %v90
  %v93 = vsel %vm60, %v85, %v92
  %v94 = vrot.slane %v89, 4
  %vm101 = vcmask 519168
  %vm102 = vmand %vm101, %vm47
  %v103 = vld [vmem:[#allocation2] sm:$0xf]
  %v104 = vsel %vm102, %v67, %v103
  %105 = vst [vmem:[#allocation2] sm:$0xf] %v104
  %vm106 = vcmask 519168
  %107 = vst.msk [vmem:[#allocation2 + $0x4] sm:$0xf] %vm106, %v76
  %v108 = vld [vmem:[#allocation2 + $0x8] sm:$0x1]
  %v109 = vsel %vm40, %v77, %v108
  %110 = vst [vmem:[#allocation2 + $0x8] sm:$0x1] %v109
  %v111 = vld [vmem:[#allocation2 + $0xc] sm:$0xf]
  %v112 = vsel %vm102, %v84, %v111
  %113 = vst [vmem:[#allocation2 + $0xc] sm:$0xf] %v112
  %114 = vst.msk [vmem:[#allocation2 + $0x10] sm:$0xf] %vm106, %v93
  %v115 = vld [vmem:[#allocation2 + $0x14] sm:$0x1]
  %v116 = vsel %vm40, %v94, %v115
  %117 = vst [vmem:[#allocation2 + $0x14] sm:$0x1] %v116
  %v118 = vld [vmem:[%s0] sm:$0xf]
  %v119 = vld [vmem:[%s0 + $0x4] sm:$0xf]
  %v120 = vld [vmem:[%s0 + $0x8] sm:$0xf]
  %v121 = vld [vmem:[%s0 + $0xc] sm:$0xf]
  %v122 = vld [vmem:[%s4] sm:$0xf]
  %v123 = vld [vmem:[%s4 + $0x4] sm:$0xf]
  %v126 = vunpack.c.l.b16 %v122
  %v127 = vunpack.c.l.b16 %v123
  %v128 = vpack.c.b16 %v127, %v126
  %v133 = vunpack.c.l.b16 %v118
  %v134 = vunpack.c.l.b16 %v119
  %v135 = vunpack.c.l.b16 %v120
  %v136 = vunpack.c.l.b16 %v121
  %v137 = vpack.c.b16 %v134, %v133
  %v138 = vpack.c.b16 %v136, %v135
  %vm141 = vcmask 261120
  %v143 = vsel %vm141, %v128, 0
  %145 = vmatprep.subr.bf16.mxu0 0
  %146 = vmatpush1.bf16.msra.mxu0 0
  %147 = vmatprep.subr.bf16.mxu0 0
  %148 = vmatpush1.bf16.msra.mxu0 0
  %149 = vmatprep.subr.bf16.mxu0 0
  %150 = vmatpush1.bf16.msra.mxu0 0
  %151 = vmatprep.subr.bf16.mxu0 0
  %152 = vmatpush1.bf16.msra.mxu0 0
  %153 = vmatprep.subr.bf16.mxu0 0
  %154 = vmatpush1.bf16.msra.mxu0 0
  %155 = vmatprep.subr.bf16.mxu0 0
  %156 = vmatpush1.bf16.msra.mxu0 0
  %157 = vmatprep.subr.bf16.mxu0 0
  %158 = vmatpush1.bf16.msra.mxu0 %v138
  %159 = vmatprep.subr.bf16.mxu0 0
  %160 = vmatpush1.bf16.msra.mxu0 %v137
  %161 = vmatprep.subr.bf16.mxu0 0
  %162 = vmatpush2.bf16.msra.mxu0 0
  %163 = vmatprep.subr.bf16.mxu0 0
  %164 = vmatpush2.bf16.msra.mxu0 0
  %165 = vmatprep.subr.bf16.mxu0 0
  %166 = vmatpush2.bf16.msra.mxu0 0
  %167 = vmatprep.subr.bf16.mxu0 0
  %168 = vmatpush2.bf16.msra.mxu0 0
  %169 = vmatprep.subr.bf16.mxu0 0
  %170 = vmatpush2.bf16.msra.mxu0 0
  %171 = vmatprep.subr.bf16.mxu0 0
  %172 = vmatpush2.bf16.msra.mxu0 0
  %173 = vmatprep.subr.bf16.mxu0 0
  %174 = vmatpush2.bf16.msra.mxu0 0
  %175 = vmatprep.subr.bf16.mxu0 0
  %176 = vmatpush2.bf16.msra.mxu0 0
  %177 = vmatprep.mubr.bf16.mxu0 0
  %178 = vmatmul.mubr.bf16.gmra.mxu0 %v143
  %v179 = vpop.f32.mrf.mxu0
  %v180 = vadd.f32 0.0, %v179
  %v181 = vpop.f32.mrf.mxu0
  %v182 = vpop.f32.mrf.mxu0
  %v183 = vadd.f32 0.0, %v182
  %v184 = vpop.f32.mrf.mxu0
  %185 = vdwg.mxu0
  %v186 = vpack.c.bf16 %v183, %v180
  %v187 = vld [vmem:[%s5] sm:$0xf]
  %v188 = vld [vmem:[%s5 + $0x4] sm:$0xf]
  %v189 = vld [vmem:[%s5 + $0x8] sm:$0xf]
  %v190 = vld [vmem:[%s5 + $0xc] sm:$0xf]
  %v191 = vld [vmem:[%s5 + $0x10] sm:$0xf]
  %v192 = vld [vmem:[%s5 + $0x14] sm:$0xf]
  %v193 = vld [vmem:[%s5 + $0x18] sm:$0xf]
  %v194 = vld [vmem:[%s5 + $0x1c] sm:$0xf]
  %v203 = vunpack.c.l.b16 %v187
  %v204 = vunpack.c.l.b16 %v188
  %v205 = vunpack.c.l.b16 %v189
  %v206 = vunpack.c.l.b16 %v190
  %v207 = vunpack.c.l.b16 %v191
  %v208 = vunpack.c.l.b16 %v192
  %v209 = vunpack.c.l.b16 %v193
  %v210 = vunpack.c.l.b16 %v194
  %v211 = vpack.c.b16 %v204, %v203
  %v212 = vpack.c.b16 %v206, %v205
  %v213 = vpack.c.b16 %v208, %v207
  %v214 = vpack.c.b16 %v210, %v209
  %vm219 = vcmask 523264
  %v221 = vsel %vm219, %v186, 0
  %223 = vmatprep.subr.bf16.mxu0 0
  %224 = vmatpush1.bf16.msra.mxu0 0
  %225 = vmatprep.subr.bf16.mxu0 0
  %226 = vmatpush1.bf16.msra.mxu0 0
  %227 = vmatprep.subr.bf16.mxu0 0
  %228 = vmatpush1.bf16.msra.mxu0 0
  %229 = vmatprep.subr.bf16.mxu0 0
  %230 = vmatpush1.bf16.msra.mxu0 0
  %231 = vmatprep.subr.bf16.mxu0 0
  %232 = vmatpush1.bf16.msra.mxu0 %v214
  %233 = vmatprep.subr.bf16.mxu0 0
  %234 = vmatpush1.bf16.msra.mxu0 %v213
  %235 = vmatprep.subr.bf16.mxu0 0
  %236 = vmatpush1.bf16.msra.mxu0 %v212
  %237 = vmatprep.subr.bf16.mxu0 0
  %238 = vmatpush1.bf16.msra.mxu0 %v211
  %239 = vmatprep.subr.bf16.mxu0 0
  %240 = vmatpush2.bf16.msra.mxu0 0
  %241 = vmatprep.subr.bf16.mxu0 0
  %242 = vmatpush2.bf16.msra.mxu0 0
  %243 = vmatprep.subr.bf16.mxu0 0
  %244 = vmatpush2.bf16.msra.mxu0 0
  %245 = vmatprep.subr.bf16.mxu0 0
  %246 = vmatpush2.bf16.msra.mxu0 0
  %247 = vmatprep.subr.bf16.mxu0 0
  %248 = vmatpush2.bf16.msra.mxu0 0
  %249 = vmatprep.subr.bf16.mxu0 0
  %250 = vmatpush2.bf16.msra.mxu0 0
  %251 = vmatprep.subr.bf16.mxu0 0
  %252 = vmatpush2.bf16.msra.mxu0 0
  %253 = vmatprep.subr.bf16.mxu0 0
  %254 = vmatpush2.bf16.msra.mxu0 0
  %255 = vmatprep.mubr.bf16.mxu0 0
  %256 = vmatmul.mubr.bf16.gmra.mxu0 %v221
  %v257 = vpop.f32.mrf.mxu0
  %v258 = vadd.f32 0.0, %v257
  %v259 = vpop.f32.mrf.mxu0
  %v260 = vpop.f32.mrf.mxu0
  %v261 = vadd.f32 0.0, %v260
  %v262 = vpop.f32.mrf.mxu0
  %263 = vdwg.mxu0
  %v264 = vpack.c.bf16 %v261, %v258
  %v265 = vld [vmem:[#allocation3] sm:$0x1]
  %v266 = vsel %vm40, 0, %v265
  %267 = vst [vmem:[#allocation3] sm:$0x1] %v266
  %v268 = vld [vmem:[#allocation3 + $0x8] sm:$0x1]
  %v269 = vsel %vm40, 0, %v268
  %270 = vst [vmem:[#allocation3 + $0x8] sm:$0x1] %v269
  %v271 = vld [vmem:[#allocation3 + $0x4] sm:$0x1]
  %v272 = vsel %vm48, 0, %v271
  %273 = vst [vmem:[#allocation3 + $0x4] sm:$0x1] %v272
  %v274 = vld [vmem:[#allocation3 + $0xc] sm:$0x1]
  %v275 = vsel %vm48, 0, %v274
  %276 = vst [vmem:[#allocation3 + $0xc] sm:$0x1] %v275
  %v277 = vld [vmem:[%s1] sm:$0xf]
  %v278 = vld [vmem:[%s1 + $0x4] sm:$0xf]
  %v280 = vshrl.u32 %v277, 16
  %v282 = vrot.slane %v280, 7
  %v283 = vshll.u32 %v277, 16
  %v285 = vor.u32 %v282, %v283
  %v286 = vrot.slane %v282, 4
  %v288 = vshrl.u32 %v278, 16
  %v290 = vrot.slane %v288, 7
  %v291 = vshll.u32 %v278, 16
  %v293 = vor.u32 %v290, %v291
  %v294 = vrot.slane %v290, 4
  %vm299 = vcmask 257024
  %vm300 = vmand %vm299, %vm47
  %v301 = vld [vmem:[#allocation3] sm:$0xf]
  %v302 = vsel %vm300, %v285, %v301
  %303 = vst [vmem:[#allocation3] sm:$0xf] %v302
  %vm304 = vcmask 253952
  %vm305 = vmand %vm304, %vm39
  %v306 = vld [vmem:[#allocation3 + $0x4] sm:$0x1]
  %v307 = vsel %vm305, %v286, %v306
  %308 = vst [vmem:[#allocation3 + $0x4] sm:$0x1] %v307
  %v309 = vld [vmem:[#allocation3 + $0x8] sm:$0xf]
  %v310 = vsel %vm300, %v293, %v309
  %311 = vst [vmem:[#allocation3 + $0x8] sm:$0xf] %v310
  %v312 = vld [vmem:[#allocation3 + $0xc] sm:$0x1]
  %v313 = vsel %vm305, %v294, %v312
  %314 = vst [vmem:[#allocation3 + $0xc] sm:$0x1] %v313
  %v316 = vunpack.c.l.b16 %v264
  %v317 = vunpack.c.h.b16 %v264
  %v318 = vpack.c.b16 %v316, %v316
  %v319 = vpack.c.b16 %v317, %v317
  %v321 = vshrl.u32 %v318, 16
  %v323 = vrot.slane %v321, 7
  %v324 = vshll.u32 %v318, 16
  %v326 = vor.u32 %v323, %v324
  %v327 = vrot.slane %v323, 4
  %v329 = vshrl.u32 %v319, 16
  %v331 = vrot.slane %v329, 7
  %v332 = vshll.u32 %v319, 16
  %v334 = vor.u32 %v331, %v332
  %v335 = vrot.slane %v331, 4
  %336 = vrot.lane.b32.xlu0 %v326, 32
  %v337 = vpop.permute.xlu0 %336
  %338 = vrot.lane.b32.xlu0 %v327, 32
  %v339 = vpop.permute.xlu0 %338
  %340 = vrot.lane.b32.xlu0 %v334, 32
  %v341 = vpop.permute.xlu0 %340
  %342 = vrot.lane.b32.xlu0 %v335, 32
  %v343 = vpop.permute.xlu0 %342
  %vm348 = vcmask 519424
  %vm349 = vmand %vm348, %vm47
  %v350 = vld [vmem:[#allocation3] sm:$0xf]
  %v351 = vsel %vm349, %v337, %v350
  %352 = vst [vmem:[#allocation3] sm:$0xf] %v351
  %vm353 = vcmask 516352
  %vm354 = vmand %vm353, %vm39
  %v355 = vld [vmem:[#allocation3 + $0x4] sm:$0x1]
  %v356 = vsel %vm354, %v339, %v355
  %357 = vst [vmem:[#allocation3 + $0x4] sm:$0x1] %v356
  %v358 = vld [vmem:[#allocation3 + $0x8] sm:$0xf]
  %v359 = vsel %vm349, %v341, %v358
  %360 = vst [vmem:[#allocation3 + $0x8] sm:$0xf] %v359
  %v361 = vld [vmem:[#allocation3 + $0xc] sm:$0x1]
  %v362 = vsel %vm354, %v343, %v361
  %363 = vst [vmem:[#allocation3 + $0xc] sm:$0x1] %v362
  %v364 = vld [vmem:[#allocation2] sm:$0xf]
  %v365 = vld [vmem:[#allocation2 + $0x4] sm:$0xf]
  %v366 = vld [vmem:[#allocation2 + $0xc] sm:$0xf]
  %v367 = vld [vmem:[#allocation2 + $0x10] sm:$0xf]
  %v368 = vld [vmem:[%s2] sm:$0xf]
  %v369 = vld [vmem:[%s2 + $0x4] sm:$0xf]
  %v370 = vld [vmem:[%s2 + $0x8] sm:$0xf]
  %v371 = vld [vmem:[%s2 + $0xc] sm:$0xf]
  %v372 = vld [vmem:[%s2 + $0x10] sm:$0xf]
  %v373 = vld [vmem:[%s2 + $0x14] sm:$0xf]
  %v374 = vld [vmem:[%s2 + $0x18] sm:$0xf]
  %v375 = vld [vmem:[%s2 + $0x1c] sm:$0xf]
  %v376 = vld [vmem:[#allocation2 + $0x8] sm:$0x1]
  %v377 = vld [vmem:[#allocation2 + $0x14] sm:$0x1]
  %vm378 = vsmask.f32 3328
  %vm379 = vsmask.f32 7440
  %vm380 = vmor %vm378, %vm379
  %v382 = vshrl.u32 %v364, 16
  %v384 = vrot.slane %v382, 4
  %v385 = vshll.u32 %v364, 16
  %v387 = vrot.slane %v385, 5
  %v388 = vor.u32 %v384, %v387
  %v389 = vrot.slane %v388, 4
  %v391 = vshll.u32 %v365, 16
  %v393 = vrot.slane %v391, 5
  %v394 = vsel %vm380, %v389, %v393
  %v395 = vshrl.u32 %v365, 16
  %v397 = vrot.slane %v395, 4
  %v398 = vor.u32 %v397, %v393
  %v399 = vrot.slane %v398, 4
  %v401 = vshll.u32 %v376, 16
  %v403 = vrot.slane %v401, 5
  %v404 = vsel %vm380, %v399, %v403
  %v406 = vshrl.u32 %v366, 16
  %v408 = vrot.slane %v406, 4
  %v409 = vshll.u32 %v366, 16
  %v411 = vrot.slane %v409, 5
  %v412 = vor.u32 %v408, %v411
  %v413 = vrot.slane %v412, 4
  %v415 = vshll.u32 %v367, 16
  %v417 = vrot.slane %v415, 5
  %v418 = vsel %vm380, %v413, %v417
  %v419 = vshrl.u32 %v367, 16
  %v421 = vrot.slane %v419, 4
  %v422 = vor.u32 %v421, %v417
  %v423 = vrot.slane %v422, 4
  %v425 = vshll.u32 %v377, 16
  %v427 = vrot.slane %v425, 5
  %v428 = vsel %vm380, %v423, %v427
  %s429 = scalar_lea.vmem %s2, 32
  %v430 = vld [vmem:[%s429] sm:$0xf]
  %v431 = vld [vmem:[%s429 + $0x4] sm:$0xf]
  %v432 = vld [vmem:[%s429 + $0x8] sm:$0xf]
  %v433 = vld [vmem:[%s429 + $0xc] sm:$0xf]
  %v434 = vld [vmem:[%s429 + $0x10] sm:$0xf]
  %v435 = vld [vmem:[%s429 + $0x14] sm:$0xf]
  %v436 = vld [vmem:[%s429 + $0x18] sm:$0xf]
  %v437 = vld [vmem:[%s429 + $0x1c] sm:$0xf]
  %v438 = vunpack.c.l.b16 %v394
  %v439 = vunpack.c.l.b16 %v404
  %v440 = vunpack.c.l.b16 %v418
  %v441 = vunpack.c.l.b16 %v428
  %v442 = vpack.c.b16 %v439, %v438
  %v443 = vpack.c.b16 %v441, %v440
  %v452 = vunpack.c.l.b16 %v430
  %v453 = vunpack.c.l.b16 %v431
  %v454 = vunpack.c.l.b16 %v432
  %v455 = vunpack.c.l.b16 %v433
  %v456 = vunpack.c.l.b16 %v434
  %v457 = vunpack.c.l.b16 %v435
  %v458 = vunpack.c.l.b16 %v436
  %v459 = vunpack.c.l.b16 %v437
  %v460 = vpack.c.b16 %v453, %v452
  %v461 = vpack.c.b16 %v455, %v454
  %v462 = vpack.c.b16 %v457, %v456
  %v463 = vpack.c.b16 %v459, %v458
  %v469 = vsel %vm219, %v442, 0
  %v472 = vsel %vm219, %v443, 0
  %474 = vmatprep.subr.bf16.mxu0 0
  %475 = vmatpush1.bf16.msra.mxu0 0
  %476 = vmatprep.subr.bf16.mxu0 0
  %477 = vmatpush1.bf16.msra.mxu0 0
  %478 = vmatprep.subr.bf16.mxu0 0
  %479 = vmatpush1.bf16.msra.mxu0 0
  %480 = vmatprep.subr.bf16.mxu0 0
  %481 = vmatpush1.bf16.msra.mxu0 0
  %482 = vmatprep.subr.bf16.mxu0 0
  %483 = vmatpush1.bf16.msra.mxu0 %v463
  %484 = vmatprep.subr.bf16.mxu0 0
  %485 = vmatpush1.bf16.msra.mxu0 %v462
  %486 = vmatprep.subr.bf16.mxu0 0
  %487 = vmatpush1.bf16.msra.mxu0 %v461
  %488 = vmatprep.subr.bf16.mxu0 0
  %489 = vmatpush1.bf16.msra.mxu0 %v460
  %490 = vmatprep.subr.bf16.mxu0 0
  %491 = vmatpush2.bf16.msra.mxu0 0
  %492 = vmatprep.subr.bf16.mxu0 0
  %493 = vmatpush2.bf16.msra.mxu0 0
  %494 = vmatprep.subr.bf16.mxu0 0
  %495 = vmatpush2.bf16.msra.mxu0 0
  %496 = vmatprep.subr.bf16.mxu0 0
  %497 = vmatpush2.bf16.msra.mxu0 0
  %498 = vmatprep.subr.bf16.mxu0 0
  %499 = vmatpush2.bf16.msra.mxu0 0
  %500 = vmatprep.subr.bf16.mxu0 0
  %501 = vmatpush2.bf16.msra.mxu0 0
  %502 = vmatprep.subr.bf16.mxu0 0
  %503 = vmatpush2.bf16.msra.mxu0 0
  %504 = vmatprep.subr.bf16.mxu0 0
  %505 = vmatpush2.bf16.msra.mxu0 0
  %506 = vmatprep.mubr.bf16.mxu0 0
  %507 = vmatmul.mubr.bf16.gmra.mxu0 %v469
  %v508 = vpop.f32.mrf.mxu0
  %v509 = vadd.f32 0.0, %v508
  %v510 = vpop.f32.mrf.mxu0
  %v511 = vpop.f32.mrf.mxu0
  %v512 = vadd.f32 0.0, %v511
  %v513 = vpop.f32.mrf.mxu0
  %514 = vmatprep.mubr.bf16.mxu0 0
  %515 = vmatmul.mubr.bf16.gmra.mxu0 %v472
  %v516 = vpop.f32.mrf.mxu0
  %v517 = vadd.f32 0.0, %v516
  %v518 = vpop.f32.mrf.mxu0
  %v519 = vpop.f32.mrf.mxu0
  %v520 = vadd.f32 0.0, %v519
  %v521 = vpop.f32.mrf.mxu0
  %522 = vdwg.mxu0
  %v527 = vunpack.c.l.b16 %v364
  %v528 = vunpack.c.l.b16 %v365
  %v529 = vunpack.c.l.b16 %v366
  %v530 = vunpack.c.l.b16 %v367
  %v531 = vpack.c.b16 %v528, %v527
  %v532 = vpack.c.b16 %v530, %v529
  %v541 = vunpack.c.l.b16 %v368
  %v542 = vunpack.c.l.b16 %v369
  %v543 = vunpack.c.l.b16 %v370
  %v544 = vunpack.c.l.b16 %v371
  %v545 = vunpack.c.l.b16 %v372
  %v546 = vunpack.c.l.b16 %v373
  %v547 = vunpack.c.l.b16 %v374
  %v548 = vunpack.c.l.b16 %v375
  %v549 = vpack.c.b16 %v542, %v541
  %v550 = vpack.c.b16 %v544, %v543
  %v551 = vpack.c.b16 %v546, %v545
  %v552 = vpack.c.b16 %v548, %v547
  %v558 = vsel %vm219, %v531, 0
  %v561 = vsel %vm219, %v532, 0
  %563 = vmatprep.subr.bf16.mxu0 0
  %564 = vmatpush1.bf16.msra.mxu0 0
  %565 = vmatprep.subr.bf16.mxu0 0
  %566 = vmatpush1.bf16.msra.mxu0 0
  %567 = vmatprep.subr.bf16.mxu0 0
  %568 = vmatpush1.bf16.msra.mxu0 0
  %569 = vmatprep.subr.bf16.mxu0 0
  %570 = vmatpush1.bf16.msra.mxu0 0
  %571 = vmatprep.subr.bf16.mxu0 0
  %572 = vmatpush1.bf16.msra.mxu0 %v552
  %573 = vmatprep.subr.bf16.mxu0 0
  %574 = vmatpush1.bf16.msra.mxu0 %v551
  %575 = vmatprep.subr.bf16.mxu0 0
  %576 = vmatpush1.bf16.msra.mxu0 %v550
  %577 = vmatprep.subr.bf16.mxu0 0
  %578 = vmatpush1.bf16.msra.mxu0 %v549
  %579 = vmatprep.subr.bf16.mxu0 0
  %580 = vmatpush2.bf16.msra.mxu0 0
  %581 = vmatprep.subr.bf16.mxu0 0
  %582 = vmatpush2.bf16.msra.mxu0 0
  %583 = vmatprep.subr.bf16.mxu0 0
  %584 = vmatpush2.bf16.msra.mxu0 0
  %585 = vmatprep.subr.bf16.mxu0 0
  %586 = vmatpush2.bf16.msra.mxu0 0
  %587 = vmatprep.subr.bf16.mxu0 0
  %588 = vmatpush2.bf16.msra.mxu0 0
  %589 = vmatprep.subr.bf16.mxu0 0
  %590 = vmatpush2.bf16.msra.mxu0 0
  %591 = vmatprep.subr.bf16.mxu0 0
  %592 = vmatpush2.bf16.msra.mxu0 0
  %593 = vmatprep.subr.bf16.mxu0 0
  %594 = vmatpush2.bf16.msra.mxu0 0
  %595 = vmatprep.mubr.bf16.mxu0 0
  %596 = vmatmul.mubr.bf16.gmra.mxu0 %v558
  %v597 = vpop.f32.mrf.mxu0
  %v598 = vadd.f32 %v509, %v597
  %v599 = vpop.f32.mrf.mxu0
  %v600 = vpop.f32.mrf.mxu0
  %v601 = vadd.f32 %v512, %v600
  %v602 = vpop.f32.mrf.mxu0
  %603 = vmatprep.mubr.bf16.mxu0 0
  %604 = vmatmul.mubr.bf16.gmra.mxu0 %v561
  %v605 = vpop.f32.mrf.mxu0
  %v606 = vadd.f32 %v517, %v605
  %v607 = vpop.f32.mrf.mxu0
  %v608 = vpop.f32.mrf.mxu0
  %v609 = vadd.f32 %v520, %v608
  %v610 = vpop.f32.mrf.mxu0
  %611 = vdwg.mxu0
  %v612 = vld [vmem:[#allocation2] sm:$0xe]
  %v613 = vld [vmem:[#allocation2 + $0xc] sm:$0xe]
  %vm618 = vcmask 1042432
  %vm619 = vcmask 1046532
  %vm620 = vmor %vm618, %vm619
  %v621 = vrot.slane %v612, 5
  %v622 = vrot.slane %v621, 4
  %v623 = vrot.slane %v365, 5
  %v624 = vsel %vm620, %v622, %v623
  %v625 = vrot.slane %v623, 4
  %v626 = vrot.slane %v376, 5
  %v627 = vsel %vm620, %v625, %v626
  %v628 = vrot.slane %v613, 5
  %v629 = vrot.slane %v628, 4
  %v630 = vrot.slane %v367, 5
  %v631 = vsel %vm620, %v629, %v630
  %v632 = vrot.slane %v630, 4
  %v633 = vrot.slane %v377, 5
  %v634 = vsel %vm620, %v632, %v633
  %s635 = scalar_lea.vmem %s2, 64
  %v636 = vld [vmem:[%s635] sm:$0xf]
  %v637 = vld [vmem:[%s635 + $0x4] sm:$0xf]
  %v638 = vld [vmem:[%s635 + $0x8] sm:$0xf]
  %v639 = vld [vmem:[%s635 + $0xc] sm:$0xf]
  %v640 = vld [vmem:[%s635 + $0x10] sm:$0xf]
  %v641 = vld [vmem:[%s635 + $0x14] sm:$0xf]
  %v642 = vld [vmem:[%s635 + $0x18] sm:$0xf]
  %v643 = vld [vmem:[%s635 + $0x1c] sm:$0xf]
  %v644 = vunpack.c.l.b16 %v624
  %v645 = vunpack.c.l.b16 %v627
  %v646 = vunpack.c.l.b16 %v631
  %v647 = vunpack.c.l.b16 %v634
  %v648 = vpack.c.b16 %v645, %v644
  %v649 = vpack.c.b16 %v647, %v646
  %v658 = vunpack.c.l.b16 %v636
  %v659 = vunpack.c.l.b16 %v637
  %v660 = vunpack.c.l.b16 %v638
  %v661 = vunpack.c.l.b16 %v639
  %v662 = vunpack.c.l.b16 %v640
  %v663 = vunpack.c.l.b16 %v641
  %v664 = vunpack.c.l.b16 %v642
  %v665 = vunpack.c.l.b16 %v643
  %v666 = vpack.c.b16 %v659, %v658
  %v667 = vpack.c.b16 %v661, %v660
  %v668 = vpack.c.b16 %v663, %v662
  %v669 = vpack.c.b16 %v665, %v664
  %v675 = vsel %vm219, %v648, 0
  %v678 = vsel %vm219, %v649, 0
  %680 = vmatprep.subr.bf16.mxu0 0
  %681 = vmatpush1.bf16.msra.mxu0 0
  %682 = vmatprep.subr.bf16.mxu0 0
  %683 = vmatpush1.bf16.msra.mxu0 0
  %684 = vmatprep.subr.bf16.mxu0 0
  %685 = vmatpush1.bf16.msra.mxu0 0
  %686 = vmatprep.subr.bf16.mxu0 0
  %687 = vmatpush1.bf16.msra.mxu0 0
  %688 = vmatprep.subr.bf16.mxu0 0
  %689 = vmatpush1.bf16.msra.mxu0 %v669
  %690 = vmatprep.subr.bf16.mxu0 0
  %691 = vmatpush1.bf16.msra.mxu0 %v668
  %692 = vmatprep.subr.bf16.mxu0 0
  %693 = vmatpush1.bf16.msra.mxu0 %v667
  %694 = vmatprep.subr.bf16.mxu0 0
  %695 = vmatpush1.bf16.msra.mxu0 %v666
  %696 = vmatprep.subr.bf16.mxu0 0
  %697 = vmatpush2.bf16.msra.mxu0 0
  %698 = vmatprep.subr.bf16.mxu0 0
  %699 = vmatpush2.bf16.msra.mxu0 0
  %700 = vmatprep.subr.bf16.mxu0 0
  %701 = vmatpush2.bf16.msra.mxu0 0
  %702 = vmatprep.subr.bf16.mxu0 0
  %703 = vmatpush2.bf16.msra.mxu0 0
  %704 = vmatprep.subr.bf16.mxu0 0
  %705 = vmatpush2.bf16.msra.mxu0 0
  %706 = vmatprep.subr.bf16.mxu0 0
  %707 = vmatpush2.bf16.msra.mxu0 0
  %708 = vmatprep.subr.bf16.mxu0 0
  %709 = vmatpush2.bf16.msra.mxu0 0
  %710 = vmatprep.subr.bf16.mxu0 0
  %711 = vmatpush2.bf16.msra.mxu0 0
  %712 = vmatprep.mubr.bf16.mxu0 0
  %713 = vmatmul.mubr.bf16.gmra.mxu0 %v675
  %v714 = vpop.f32.mrf.mxu0
  %v715 = vadd.f32 0.0, %v714
  %v716 = vpop.f32.mrf.mxu0
  %v717 = vpop.f32.mrf.mxu0
  %v718 = vadd.f32 0.0, %v717
  %v719 = vpop.f32.mrf.mxu0
  %720 = vmatprep.mubr.bf16.mxu0 0
  %721 = vmatmul.mubr.bf16.gmra.mxu0 %v678
  %v722 = vpop.f32.mrf.mxu0
  %v723 = vadd.f32 0.0, %v722
  %v724 = vpop.f32.mrf.mxu0
  %v725 = vpop.f32.mrf.mxu0
  %v726 = vadd.f32 0.0, %v725
  %v727 = vpop.f32.mrf.mxu0
  %728 = vdwg.mxu0
  %v729 = vadd.f32 %v598, %v715
  %v730 = vadd.f32 %v601, %v718
  %v731 = vadd.f32 %v606, %v723
  %v732 = vadd.f32 %v609, %v726
  %v733 = vld [vmem:[#allocation3] sm:$0xf]
  %v734 = vld [vmem:[#allocation3 + $0x8] sm:$0xf]
  %v735 = vld [vmem:[%s3] sm:$0xff]
  %v736 = vld [vmem:[%s3 + $0x8] sm:$0xff]
  %v737 = vld [vmem:[%s3 + $0x10] sm:$0xff]
  %v738 = vld [vmem:[%s3 + $0x18] sm:$0xff]
  %v739 = vld [vmem:[%s3 + $0x20] sm:$0xff]
  %v740 = vld [vmem:[%s3 + $0x28] sm:$0xff]
  %v741 = vld [vmem:[%s3 + $0x30] sm:$0xff]
  %v742 = vld [vmem:[%s3 + $0x38] sm:$0xff]
  %v743 = vld [vmem:[#allocation3 + $0x4] sm:$0x1]
  %v744 = vld [vmem:[#allocation3 + $0xc] sm:$0x1]
  %v746 = vshrl.u32 %v733, 16
  %v748 = vrot.slane %v746, 4
  %v749 = vshll.u32 %v733, 16
  %v751 = vrot.slane %v749, 5
  %v752 = vor.u32 %v748, %v751
  %v753 = vrot.slane %v752, 4
  %v755 = vshll.u32 %v743, 16
  %v757 = vrot.slane %v755, 5
  %v758 = vsel %vm380, %v753, %v757
  %v760 = vshrl.u32 %v734, 16
  %v762 = vrot.slane %v760, 4
  %v763 = vshll.u32 %v734, 16
  %v765 = vrot.slane %v763, 5
  %v766 = vor.u32 %v762, %v765
  %v767 = vrot.slane %v766, 4
  %v769 = vshll.u32 %v744, 16
  %v771 = vrot.slane %v769, 5
  %v772 = vsel %vm380, %v767, %v771
  %s773 = scalar_lea.vmem %s3, 64
  %v774 = vld [vmem:[%s773] sm:$0xff]
  %v775 = vld [vmem:[%s773 + $0x8] sm:$0xff]
  %v776 = vld [vmem:[%s773 + $0x10] sm:$0xff]
  %v777 = vld [vmem:[%s773 + $0x18] sm:$0xff]
  %v778 = vld [vmem:[%s773 + $0x20] sm:$0xff]
  %v779 = vld [vmem:[%s773 + $0x28] sm:$0xff]
  %v780 = vld [vmem:[%s773 + $0x30] sm:$0xff]
  %v781 = vld [vmem:[%s773 + $0x38] sm:$0xff]
  %v782 = vunpack.c.l.b16 %v758
  %v783 = vunpack.c.l.b16 %v772
  %v784 = vpack.c.b16 %v783, %v782
  %v793 = vunpack.c.l.b16 %v774
  %v794 = vunpack.c.h.b16 %v774
  %v795 = vunpack.c.l.b16 %v775
  %v796 = vunpack.c.h.b16 %v775
  %v797 = vunpack.c.l.b16 %v776
  %v798 = vunpack.c.h.b16 %v776
  %v799 = vunpack.c.l.b16 %v777
  %v800 = vunpack.c.h.b16 %v777
  %v801 = vunpack.c.l.b16 %v778
  %v802 = vunpack.c.h.b16 %v778
  %v803 = vunpack.c.l.b16 %v779
  %v804 = vunpack.c.h.b16 %v779
  %v805 = vunpack.c.l.b16 %v780
  %v806 = vunpack.c.h.b16 %v780
  %v807 = vunpack.c.l.b16 %v781
  %v808 = vunpack.c.h.b16 %v781
  %v809 = vpack.c.b16 %v795, %v793
  %v810 = vpack.c.b16 %v796, %v794
  %v811 = vpack.c.b16 %v799, %v797
  %v812 = vpack.c.b16 %v800, %v798
  %v813 = vpack.c.b16 %v803, %v801
  %v814 = vpack.c.b16 %v804, %v802
  %v815 = vpack.c.b16 %v807, %v805
  %v816 = vpack.c.b16 %v808, %v806
  %v826 = vsel %vm219, %v784, 0
  %828 = vmatprep.subr.bf16.mxu0 0
  %829 = vmatpush1.bf16.msra.mxu0 0
  %830 = vmatprep.subr.bf16.mxu0 0
  %831 = vmatpush1.bf16.msra.mxu0 0
  %832 = vmatprep.subr.bf16.mxu0 0
  %833 = vmatpush1.bf16.msra.mxu0 0
  %834 = vmatprep.subr.bf16.mxu0 0
  %835 = vmatpush1.bf16.msra.mxu0 0
  %836 = vmatprep.subr.bf16.mxu0 %v816
  %837 = vmatpush1.bf16.msra.mxu0 %v815
  %838 = vmatprep.subr.bf16.mxu0 %v814
  %839 = vmatpush1.bf16.msra.mxu0 %v813
  %840 = vmatprep.subr.bf16.mxu0 %v812
  %841 = vmatpush1.bf16.msra.mxu0 %v811
  %842 = vmatprep.subr.bf16.mxu0 %v810
  %843 = vmatpush1.bf16.msra.mxu0 %v809
  %844 = vmatprep.subr.bf16.mxu0 0
  %845 = vmatpush2.bf16.msra.mxu0 0
  %846 = vmatprep.subr.bf16.mxu0 0
  %847 = vmatpush2.bf16.msra.mxu0 0
  %848 = vmatprep.subr.bf16.mxu0 0
  %849 = vmatpush2.bf16.msra.mxu0 0
  %850 = vmatprep.subr.bf16.mxu0 0
  %851 = vmatpush2.bf16.msra.mxu0 0
  %852 = vmatprep.subr.bf16.mxu0 0
  %853 = vmatpush2.bf16.msra.mxu0 0
  %854 = vmatprep.subr.bf16.mxu0 0
  %855 = vmatpush2.bf16.msra.mxu0 0
  %856 = vmatprep.subr.bf16.mxu0 0
  %857 = vmatpush2.bf16.msra.mxu0 0
  %858 = vmatprep.subr.bf16.mxu0 0
  %859 = vmatpush2.bf16.msra.mxu0 0
  %860 = vmatprep.mubr.bf16.mxu0 0
  %861 = vmatmul.mubr.bf16.gmra.mxu0 %v826
  %v862 = vpop.f32.mrf.mxu0
  %v863 = vadd.f32 0.0, %v862
  %v864 = vpop.f32.mrf.mxu0
  %v865 = vadd.f32 0.0, %v864
  %v866 = vpop.f32.mrf.mxu0
  %v867 = vadd.f32 0.0, %v866
  %v868 = vpop.f32.mrf.mxu0
  %v869 = vadd.f32 0.0, %v868
  %870 = vdwg.mxu0
  %v873 = vunpack.c.l.b16 %v733
  %v874 = vunpack.c.l.b16 %v734
  %v875 = vpack.c.b16 %v874, %v873
  %v884 = vunpack.c.l.b16 %v735
  %v885 = vunpack.c.h.b16 %v735
  %v886 = vunpack.c.l.b16 %v736
  %v887 = vunpack.c.h.b16 %v736
  %v888 = vunpack.c.l.b16 %v737
  %v889 = vunpack.c.h.b16 %v737
  %v890 = vunpack.c.l.b16 %v738
  %v891 = vunpack.c.h.b16 %v738
  %v892 = vunpack.c.l.b16 %v739
  %v893 = vunpack.c.h.b16 %v739
  %v894 = vunpack.c.l.b16 %v740
  %v895 = vunpack.c.h.b16 %v740
  %v896 = vunpack.c.l.b16 %v741
  %v897 = vunpack.c.h.b16 %v741
  %v898 = vunpack.c.l.b16 %v742
  %v899 = vunpack.c.h.b16 %v742
  %v900 = vpack.c.b16 %v886, %v884
  %v901 = vpack.c.b16 %v887, %v885
  %v902 = vpack.c.b16 %v890, %v888
  %v903 = vpack.c.b16 %v891, %v889
  %v904 = vpack.c.b16 %v894, %v892
  %v905 = vpack.c.b16 %v895, %v893
  %v906 = vpack.c.b16 %v898, %v896
  %v907 = vpack.c.b16 %v899, %v897
  %v917 = vsel %vm219, %v875, 0
  %919 = vmatprep.subr.bf16.mxu0 0
  %920 = vmatpush1.bf16.msra.mxu0 0
  %921 = vmatprep.subr.bf16.mxu0 0
  %922 = vmatpush1.bf16.msra.mxu0 0
  %923 = vmatprep.subr.bf16.mxu0 0
  %924 = vmatpush1.bf16.msra.mxu0 0
  %925 = vmatprep.subr.bf16.mxu0 0
  %926 = vmatpush1.bf16.msra.mxu0 0
  %927 = vmatprep.subr.bf16.mxu0 %v907
  %928 = vmatpush1.bf16.msra.mxu0 %v906
  %929 = vmatprep.subr.bf16.mxu0 %v905
  %930 = vmatpush1.bf16.msra.mxu0 %v904
  %931 = vmatprep.subr.bf16.mxu0 %v903
  %932 = vmatpush1.bf16.msra.mxu0 %v902
  %933 = vmatprep.subr.bf16.mxu0 %v901
  %934 = vmatpush1.bf16.msra.mxu0 %v900
  %935 = vmatprep.subr.bf16.mxu0 0
  %936 = vmatpush2.bf16.msra.mxu0 0
  %937 = vmatprep.subr.bf16.mxu0 0
  %938 = vmatpush2.bf16.msra.mxu0 0
  %939 = vmatprep.subr.bf16.mxu0 0
  %940 = vmatpush2.bf16.msra.mxu0 0
  %941 = vmatprep.subr.bf16.mxu0 0
  %942 = vmatpush2.bf16.msra.mxu0 0
  %943 = vmatprep.subr.bf16.mxu0 0
  %944 = vmatpush2.bf16.msra.mxu0 0
  %945 = vmatprep.subr.bf16.mxu0 0
  %946 = vmatpush2.bf16.msra.mxu0 0
  %947 = vmatprep.subr.bf16.mxu0 0
  %948 = vmatpush2.bf16.msra.mxu0 0
  %949 = vmatprep.subr.bf16.mxu0 0
  %950 = vmatpush2.bf16.msra.mxu0 0
  %951 = vmatprep.mubr.bf16.mxu0 0
  %952 = vmatmul.mubr.bf16.gmra.mxu0 %v917
  %v953 = vpop.f32.mrf.mxu0
  %v954 = vadd.f32 %v863, %v953
  %v955 = vpop.f32.mrf.mxu0
  %v956 = vadd.f32 %v865, %v955
  %v957 = vpop.f32.mrf.mxu0
  %v958 = vadd.f32 %v867, %v957
  %v959 = vpop.f32.mrf.mxu0
  %v960 = vadd.f32 %v869, %v959
  %961 = vdwg.mxu0
  %v962 = vld [vmem:[#allocation3] sm:$0xe]
  %v963 = vld [vmem:[#allocation3 + $0x8] sm:$0xe]
  %v968 = vrot.slane %v962, 5
  %v969 = vrot.slane %v968, 4
  %v970 = vrot.slane %v743, 5
  %v971 = vsel %vm620, %v969, %v970
  %v972 = vrot.slane %v963, 5
  %v973 = vrot.slane %v972, 4
  %v974 = vrot.slane %v744, 5
  %v975 = vsel %vm620, %v973, %v974
  %s976 = scalar_lea.vmem %s3, 128
  %v977 = vld [vmem:[%s976] sm:$0xff]
  %v978 = vld [vmem:[%s976 + $0x8] sm:$0xff]
  %v979 = vld [vmem:[%s976 + $0x10] sm:$0xff]
  %v980 = vld [vmem:[%s976 + $0x18] sm:$0xff]
  %v981 = vld [vmem:[%s976 + $0x20] sm:$0xff]
  %v982 = vld [vmem:[%s976 + $0x28] sm:$0xff]
  %v983 = vld [vmem:[%s976 + $0x30] sm:$0xff]
  %v984 = vld [vmem:[%s976 + $0x38] sm:$0xff]
  %v985 = vunpack.c.l.b16 %v971
  %v986 = vunpack.c.l.b16 %v975
  %v987 = vpack.c.b16 %v986, %v985
  %v996 = vunpack.c.l.b16 %v977
  %v997 = vunpack.c.h.b16 %v977
  %v998 = vunpack.c.l.b16 %v978
  %v999 = vunpack.c.h.b16 %v978
  %v1000 = vunpack.c.l.b16 %v979
  %v1001 = vunpack.c.h.b16 %v979
  %v1002 = vunpack.c.l.b16 %v980
  %v1003 = vunpack.c.h.b16 %v980
  %v1004 = vunpack.c.l.b16 %v981
  %v1005 = vunpack.c.h.b16 %v981
  %v1006 = vunpack.c.l.b16 %v982
  %v1007 = vunpack.c.h.b16 %v982
  %v1008 = vunpack.c.l.b16 %v983
  %v1009 = vunpack.c.h.b16 %v983
  %v1010 = vunpack.c.l.b16 %v984
  %v1011 = vunpack.c.h.b16 %v984
  %v1012 = vpack.c.b16 %v998, %v996
  %v1013 = vpack.c.b16 %v999, %v997
  %v1014 = vpack.c.b16 %v1002, %v1000
  %v1015 = vpack.c.b16 %v1003, %v1001
  %v1016 = vpack.c.b16 %v1006, %v1004
  %v1017 = vpack.c.b16 %v1007, %v1005
  %v1018 = vpack.c.b16 %v1010, %v1008
  %v1019 = vpack.c.b16 %v1011, %v1009
  %v1029 = vsel %vm219, %v987, 0
  %1031 = vmatprep.subr.bf16.mxu0 0
  %1032 = vmatpush1.bf16.msra.mxu0 0
  %1033 = vmatprep.subr.bf16.mxu0 0
  %1034 = vmatpush1.bf16.msra.mxu0 0
  %1035 = vmatprep.subr.bf16.mxu0 0
  %1036 = vmatpush1.bf16.msra.mxu0 0
  %1037 = vmatprep.subr.bf16.mxu0 0
  %1038 = vmatpush1.bf16.msra.mxu0 0
  %1039 = vmatprep.subr.bf16.mxu0 %v1019
  %1040 = vmatpush1.bf16.msra.mxu0 %v1018
  %1041 = vmatprep.subr.bf16.mxu0 %v1017
  %1042 = vmatpush1.bf16.msra.mxu0 %v1016
  %1043 = vmatprep.subr.bf16.mxu0 %v1015
  %1044 = vmatpush1.bf16.msra.mxu0 %v1014
  %1045 = vmatprep.subr.bf16.mxu0 %v1013
  %1046 = vmatpush1.bf16.msra.mxu0 %v1012
  %1047 = vmatprep.subr.bf16.mxu0 0
  %1048 = vmatpush2.bf16.msra.mxu0 0
  %1049 = vmatprep.subr.bf16.mxu0 0
  %1050 = vmatpush2.bf16.msra.mxu0 0
  %1051 = vmatprep.subr.bf16.mxu0 0
  %1052 = vmatpush2.bf16.msra.mxu0 0
  %1053 = vmatprep.subr.bf16.mxu0 0
  %1054 = vmatpush2.bf16.msra.mxu0 0
  %1055 = vmatprep.subr.bf16.mxu0 0
  %1056 = vmatpush2.bf16.msra.mxu0 0
  %1057 = vmatprep.subr.bf16.mxu0 0
  %1058 = vmatpush2.bf16.msra.mxu0 0
  %1059 = vmatprep.subr.bf16.mxu0 0
  %1060 = vmatpush2.bf16.msra.mxu0 0
  %1061 = vmatprep.subr.bf16.mxu0 0
  %1062 = vmatpush2.bf16.msra.mxu0 0
  %1063 = vmatprep.mubr.bf16.mxu0 0
  %1064 = vmatmul.mubr.bf16.gmra.mxu0 %v1029
  %v1065 = vpop.f32.mrf.mxu0
  %v1066 = vadd.f32 0.0, %v1065
  %v1067 = vpop.f32.mrf.mxu0
  %v1068 = vadd.f32 0.0, %v1067
  %v1069 = vpop.f32.mrf.mxu0
  %v1070 = vadd.f32 0.0, %v1069
  %v1071 = vpop.f32.mrf.mxu0
  %v1072 = vadd.f32 0.0, %v1071
  %1073 = vdwg.mxu0
  %v1074 = vadd.f32 %v954, %v1066
  %v1075 = vadd.f32 %v956, %v1068
  %v1076 = vadd.f32 %v958, %v1070
  %v1077 = vadd.f32 %v960, %v1072
  %v1082 = vcombine.low %v1074, %v1075
  %v1083 = vcombine.high %v1074, %v1075
  %v1085 = vunpack.c.l.s4 1966171168
  %v1086 = vunpack.c.0.s8 %v1085
  %v1087 = vlaneseq
  %v1088 = vshrl.u32 %v1087, 7
  %v1089 = vsub.s32 %v1086, %v1088
  %v1090 = vrot.slane %v1082, %v1089
  %v1092 = vunpack.c.l.s4 1966171168
  %v1093 = vunpack.c.0.s8 %v1092
  %v1094 = vlaneseq
  %v1095 = vshrl.u32 %v1094, 7
  %v1096 = vsub.s32 %v1093, %v1095
  %v1097 = vrot.slane %v1083, %v1096
  %v1098 = vcombine.high %v1090, %v1090
  %v1099 = vcombine.high %v1097, %v1097
  %v1101 = vunpack.c.l.s4 1966171168
  %v1102 = vunpack.c.0.s8 %v1101
  %v1103 = vlaneseq
  %v1104 = vshrl.u32 %v1103, 7
  %v1105 = vsub.s32 %v1102, %v1104
  %v1106 = vrot.slane %v1090, %v1105
  %v1108 = vunpack.c.l.s4 1966171168
  %v1109 = vunpack.c.0.s8 %v1108
  %v1110 = vlaneseq
  %v1111 = vshrl.u32 %v1110, 7
  %v1112 = vsub.s32 %v1109, %v1111
  %v1113 = vrot.slane %v1097, %v1112
  %v1115 = vunpack.c.l.s4 1966171168
  %v1116 = vunpack.c.0.s8 %v1115
  %v1117 = vlaneseq
  %v1118 = vshrl.u32 %v1117, 7
  %v1119 = vsub.s32 %v1116, %v1118
  %v1120 = vrot.slane %v1098, %v1119
  %v1122 = vunpack.c.l.s4 1966171168
  %v1123 = vunpack.c.0.s8 %v1122
  %v1124 = vlaneseq
  %v1125 = vshrl.u32 %v1124, 7
  %v1126 = vsub.s32 %v1123, %v1125
  %v1127 = vrot.slane %v1099, %v1126
  %v1128 = vcombine.high %v1106, %v1106
  %v1129 = vcombine.high %v1113, %v1113
  %v1130 = vcombine.high %v1120, %v1120
  %v1131 = vcombine.high %v1127, %v1127
  %v1132 = vcombine.low %v1076, %v1077
  %v1133 = vcombine.high %v1076, %v1077
  %v1135 = vunpack.c.l.s4 1966171168
  %v1136 = vunpack.c.0.s8 %v1135
  %v1137 = vlaneseq
  %v1138 = vshrl.u32 %v1137, 7
  %v1139 = vsub.s32 %v1136, %v1138
  %v1140 = vrot.slane %v1132, %v1139
  %v1142 = vunpack.c.l.s4 1966171168
  %v1143 = vunpack.c.0.s8 %v1142
  %v1144 = vlaneseq
  %v1145 = vshrl.u32 %v1144, 7
  %v1146 = vsub.s32 %v1143, %v1145
  %v1147 = vrot.slane %v1133, %v1146
  %v1148 = vcombine.high %v1140, %v1140
  %v1149 = vcombine.high %v1147, %v1147
  %v1151 = vunpack.c.l.s4 1966171168
  %v1152 = vunpack.c.0.s8 %v1151
  %v1153 = vlaneseq
  %v1154 = vshrl.u32 %v1153, 7
  %v1155 = vsub.s32 %v1152, %v1154
  %v1156 = vrot.slane %v1140, %v1155
  %v1158 = vunpack.c.l.s4 1966171168
  %v1159 = vunpack.c.0.s8 %v1158
  %v1160 = vlaneseq
  %v1161 = vshrl.u32 %v1160, 7
  %v1162 = vsub.s32 %v1159, %v1161
  %v1163 = vrot.slane %v1147, %v1162
  %v1165 = vunpack.c.l.s4 1966171168
  %v1166 = vunpack.c.0.s8 %v1165
  %v1167 = vlaneseq
  %v1168 = vshrl.u32 %v1167, 7
  %v1169 = vsub.s32 %v1166, %v1168
  %v1170 = vrot.slane %v1148, %v1169
  %v1172 = vunpack.c.l.s4 1966171168
  %v1173 = vunpack.c.0.s8 %v1172
  %v1174 = vlaneseq
  %v1175 = vshrl.u32 %v1174, 7
  %v1176 = vsub.s32 %v1173, %v1175
  %v1177 = vrot.slane %v1149, %v1176
  %v1178 = vcombine.high %v1156, %v1156
  %v1179 = vcombine.high %v1163, %v1163
  %v1180 = vcombine.high %v1170, %v1170
  %v1181 = vcombine.high %v1177, %v1177
  %v1182 = vlaneseq
  %v1183 = vshrl.u32 %v1182, 7
  %v1184 = vsub.s32 0, %v1183
  %v1185 = vrot.slane %v1106, %v1184
  %v1186 = vlaneseq
  %v1187 = vshrl.u32 %v1186, 7
  %v1188 = vsub.s32 1, %v1187
  %v1189 = vrot.slane %v1106, %v1188
  %v1190 = vlaneseq
  %v1191 = vshrl.u32 %v1190, 7
  %v1192 = vsub.s32 0, %v1191
  %v1193 = vrot.slane %v1120, %v1192
  %v1194 = vlaneseq
  %v1195 = vshrl.u32 %v1194, 7
  %v1196 = vsub.s32 1, %v1195
  %v1197 = vrot.slane %v1120, %v1196
  %v1198 = vlaneseq
  %v1199 = vshrl.u32 %v1198, 7
  %v1200 = vsub.s32 0, %v1199
  %v1201 = vrot.slane %v1128, %v1200
  %v1202 = vlaneseq
  %v1203 = vshrl.u32 %v1202, 7
  %v1204 = vsub.s32 1, %v1203
  %v1205 = vrot.slane %v1128, %v1204
  %v1206 = vlaneseq
  %v1207 = vshrl.u32 %v1206, 7
  %v1208 = vsub.s32 0, %v1207
  %v1209 = vrot.slane %v1130, %v1208
  %v1210 = vlaneseq
  %v1211 = vshrl.u32 %v1210, 7
  %v1212 = vsub.s32 1, %v1211
  %v1213 = vrot.slane %v1130, %v1212
  %v1214 = vlaneseq
  %v1215 = vshrl.u32 %v1214, 7
  %v1216 = vsub.s32 0, %v1215
  %v1217 = vrot.slane %v1113, %v1216
  %v1218 = vlaneseq
  %v1219 = vshrl.u32 %v1218, 7
  %v1220 = vsub.s32 1, %v1219
  %v1221 = vrot.slane %v1113, %v1220
  %v1222 = vlaneseq
  %v1223 = vshrl.u32 %v1222, 7
  %v1224 = vsub.s32 0, %v1223
  %v1225 = vrot.slane %v1127, %v1224
  %v1226 = vlaneseq
  %v1227 = vshrl.u32 %v1226, 7
  %v1228 = vsub.s32 1, %v1227
  %v1229 = vrot.slane %v1127, %v1228
  %v1230 = vlaneseq
  %v1231 = vshrl.u32 %v1230, 7
  %v1232 = vsub.s32 0, %v1231
  %v1233 = vrot.slane %v1129, %v1232
  %v1234 = vlaneseq
  %v1235 = vshrl.u32 %v1234, 7
  %v1236 = vsub.s32 1, %v1235
  %v1237 = vrot.slane %v1129, %v1236
  %v1238 = vlaneseq
  %v1239 = vshrl.u32 %v1238, 7
  %v1240 = vsub.s32 0, %v1239
  %v1241 = vrot.slane %v1131, %v1240
  %v1242 = vlaneseq
  %v1243 = vshrl.u32 %v1242, 7
  %v1244 = vsub.s32 1, %v1243
  %v1245 = vrot.slane %v1131, %v1244
  %v1246 = vlaneseq
  %v1247 = vshrl.u32 %v1246, 7
  %v1248 = vsub.s32 0, %v1247
  %v1249 = vrot.slane %v1156, %v1248
  %v1250 = vlaneseq
  %v1251 = vshrl.u32 %v1250, 7
  %v1252 = vsub.s32 1, %v1251
  %v1253 = vrot.slane %v1156, %v1252
  %v1254 = vlaneseq
  %v1255 = vshrl.u32 %v1254, 7
  %v1256 = vsub.s32 0, %v1255
  %v1257 = vrot.slane %v1170, %v1256
  %v1258 = vlaneseq
  %v1259 = vshrl.u32 %v1258, 7
  %v1260 = vsub.s32 1, %v1259
  %v1261 = vrot.slane %v1170, %v1260
  %v1262 = vlaneseq
  %v1263 = vshrl.u32 %v1262, 7
  %v1264 = vsub.s32 0, %v1263
  %v1265 = vrot.slane %v1178, %v1264
  %v1266 = vlaneseq
  %v1267 = vshrl.u32 %v1266, 7
  %v1268 = vsub.s32 1, %v1267
  %v1269 = vrot.slane %v1178, %v1268
  %v1270 = vlaneseq
  %v1271 = vshrl.u32 %v1270, 7
  %v1272 = vsub.s32 0, %v1271
  %v1273 = vrot.slane %v1180, %v1272
  %v1274 = vlaneseq
  %v1275 = vshrl.u32 %v1274, 7
  %v1276 = vsub.s32 1, %v1275
  %v1277 = vrot.slane %v1180, %v1276
  %v1278 = vlaneseq
  %v1279 = vshrl.u32 %v1278, 7
  %v1280 = vsub.s32 0, %v1279
  %v1281 = vrot.slane %v1163, %v1280
  %v1282 = vlaneseq
  %v1283 = vshrl.u32 %v1282, 7
  %v1284 = vsub.s32 1, %v1283
  %v1285 = vrot.slane %v1163, %v1284
  %v1286 = vlaneseq
  %v1287 = vshrl.u32 %v1286, 7
  %v1288 = vsub.s32 0, %v1287
  %v1289 = vrot.slane %v1177, %v1288
  %v1290 = vlaneseq
  %v1291 = vshrl.u32 %v1290, 7
  %v1292 = vsub.s32 1, %v1291
  %v1293 = vrot.slane %v1177, %v1292
  %v1294 = vlaneseq
  %v1295 = vshrl.u32 %v1294, 7
  %v1296 = vsub.s32 0, %v1295
  %v1297 = vrot.slane %v1179, %v1296
  %v1298 = vlaneseq
  %v1299 = vshrl.u32 %v1298, 7
  %v1300 = vsub.s32 1, %v1299
  %v1301 = vrot.slane %v1179, %v1300
  %v1302 = vlaneseq
  %v1303 = vshrl.u32 %v1302, 7
  %v1304 = vsub.s32 0, %v1303
  %v1305 = vrot.slane %v1181, %v1304
  %v1306 = vlaneseq
  %v1307 = vshrl.u32 %v1306, 7
  %v1308 = vsub.s32 1, %v1307
  %v1309 = vrot.slane %v1181, %v1308
  %v1310 = vcombine.low %v1185, %v1189
  %v1312 = vunpack.c.l.s4 1983009808
  %v1313 = vunpack.c.0.s8 %v1312
  %v1314 = vlaneseq
  %v1315 = vshrl.u32 %v1314, 7
  %v1316 = vsub.s32 %v1313, %v1315
  %v1317 = vrot.slane %v1310, %v1316
  %v1318 = vcombine.low %v1193, %v1197
  %v1320 = vunpack.c.l.s4 1983009808
  %v1321 = vunpack.c.0.s8 %v1320
  %v1322 = vlaneseq
  %v1323 = vshrl.u32 %v1322, 7
  %v1324 = vsub.s32 %v1321, %v1323
  %v1325 = vrot.slane %v1318, %v1324
  %v1326 = vcombine.low %v1201, %v1205
  %v1328 = vunpack.c.l.s4 1983009808
  %v1329 = vunpack.c.0.s8 %v1328
  %v1330 = vlaneseq
  %v1331 = vshrl.u32 %v1330, 7
  %v1332 = vsub.s32 %v1329, %v1331
  %v1333 = vrot.slane %v1326, %v1332
  %v1334 = vcombine.low %v1209, %v1213
  %v1336 = vunpack.c.l.s4 1983009808
  %v1337 = vunpack.c.0.s8 %v1336
  %v1338 = vlaneseq
  %v1339 = vshrl.u32 %v1338, 7
  %v1340 = vsub.s32 %v1337, %v1339
  %v1341 = vrot.slane %v1334, %v1340
  %v1342 = vcombine.low %v1217, %v1221
  %v1344 = vunpack.c.l.s4 1983009808
  %v1345 = vunpack.c.0.s8 %v1344
  %v1346 = vlaneseq
  %v1347 = vshrl.u32 %v1346, 7
  %v1348 = vsub.s32 %v1345, %v1347
  %v1349 = vrot.slane %v1342, %v1348
  %v1350 = vcombine.low %v1225, %v1229
  %v1352 = vunpack.c.l.s4 1983009808
  %v1353 = vunpack.c.0.s8 %v1352
  %v1354 = vlaneseq
  %v1355 = vshrl.u32 %v1354, 7
  %v1356 = vsub.s32 %v1353, %v1355
  %v1357 = vrot.slane %v1350, %v1356
  %v1358 = vcombine.low %v1233, %v1237
  %v1360 = vunpack.c.l.s4 1983009808
  %v1361 = vunpack.c.0.s8 %v1360
  %v1362 = vlaneseq
  %v1363 = vshrl.u32 %v1362, 7
  %v1364 = vsub.s32 %v1361, %v1363
  %v1365 = vrot.slane %v1358, %v1364
  %v1366 = vcombine.low %v1241, %v1245
  %v1368 = vunpack.c.l.s4 1983009808
  %v1369 = vunpack.c.0.s8 %v1368
  %v1370 = vlaneseq
  %v1371 = vshrl.u32 %v1370, 7
  %v1372 = vsub.s32 %v1369, %v1371
  %v1373 = vrot.slane %v1366, %v1372
  %v1374 = vcombine.low %v1249, %v1253
  %v1376 = vunpack.c.l.s4 1983009808
  %v1377 = vunpack.c.0.s8 %v1376
  %v1378 = vlaneseq
  %v1379 = vshrl.u32 %v1378, 7
  %v1380 = vsub.s32 %v1377, %v1379
  %v1381 = vrot.slane %v1374, %v1380
  %v1382 = vcombine.low %v1257, %v1261
  %v1384 = vunpack.c.l.s4 1983009808
  %v1385 = vunpack.c.0.s8 %v1384
  %v1386 = vlaneseq
  %v1387 = vshrl.u32 %v1386, 7
  %v1388 = vsub.s32 %v1385, %v1387
  %v1389 = vrot.slane %v1382, %v1388
  %v1390 = vcombine.low %v1265, %v1269
  %v1392 = vunpack.c.l.s4 1983009808
  %v1393 = vunpack.c.0.s8 %v1392
  %v1394 = vlaneseq
  %v1395 = vshrl.u32 %v1394, 7
  %v1396 = vsub.s32 %v1393, %v1395
  %v1397 = vrot.slane %v1390, %v1396
  %v1398 = vcombine.low %v1273, %v1277
  %v1400 = vunpack.c.l.s4 1983009808
  %v1401 = vunpack.c.0.s8 %v1400
  %v1402 = vlaneseq
  %v1403 = vshrl.u32 %v1402, 7
  %v1404 = vsub.s32 %v1401, %v1403
  %v1405 = vrot.slane %v1398, %v1404
  %v1406 = vcombine.low %v1281, %v1285
  %v1408 = vunpack.c.l.s4 1983009808
  %v1409 = vunpack.c.0.s8 %v1408
  %v1410 = vlaneseq
  %v1411 = vshrl.u32 %v1410, 7
  %v1412 = vsub.s32 %v1409, %v1411
  %v1413 = vrot.slane %v1406, %v1412
  %v1414 = vcombine.low %v1289, %v1293
  %v1416 = vunpack.c.l.s4 1983009808
  %v1417 = vunpack.c.0.s8 %v1416
  %v1418 = vlaneseq
  %v1419 = vshrl.u32 %v1418, 7
  %v1420 = vsub.s32 %v1417, %v1419
  %v1421 = vrot.slane %v1414, %v1420
  %v1422 = vcombine.low %v1297, %v1301
  %v1424 = vunpack.c.l.s4 1983009808
  %v1425 = vunpack.c.0.s8 %v1424
  %v1426 = vlaneseq
  %v1427 = vshrl.u32 %v1426, 7
  %v1428 = vsub.s32 %v1425, %v1427
  %v1429 = vrot.slane %v1422, %v1428
  %v1430 = vcombine.low %v1305, %v1309
  %v1432 = vunpack.c.l.s4 1983009808
  %v1433 = vunpack.c.0.s8 %v1432
  %v1434 = vlaneseq
  %v1435 = vshrl.u32 %v1434, 7
  %v1436 = vsub.s32 %v1433, %v1435
  %v1437 = vrot.slane %v1430, %v1436
  %v1438 = vcombine.low %v1317, %v1325
  %v1439 = vcombine.low %v1333, %v1341
  %v1441 = vunpack.c.l.s4 1983009808
  %v1442 = vunpack.c.0.s8 %v1441
  %v1443 = vlaneseq
  %v1444 = vshrl.u32 %v1443, 7
  %v1445 = vsub.s32 %v1442, %v1444
  %v1446 = vrot.slane %v1438, %v1445
  %v1448 = vunpack.c.l.s4 1983009808
  %v1449 = vunpack.c.0.s8 %v1448
  %v1450 = vlaneseq
  %v1451 = vshrl.u32 %v1450, 7
  %v1452 = vsub.s32 %v1449, %v1451
  %v1453 = vrot.slane %v1439, %v1452
  %v1454 = vcombine.low %v1446, %v1453
  %v1455 = vcombine.high %v1446, %v1453
  %v1456 = vcombine.low %v1349, %v1357
  %v1457 = vcombine.low %v1365, %v1373
  %v1459 = vunpack.c.l.s4 1983009808
  %v1460 = vunpack.c.0.s8 %v1459
  %v1461 = vlaneseq
  %v1462 = vshrl.u32 %v1461, 7
  %v1463 = vsub.s32 %v1460, %v1462
  %v1464 = vrot.slane %v1456, %v1463
  %v1466 = vunpack.c.l.s4 1983009808
  %v1467 = vunpack.c.0.s8 %v1466
  %v1468 = vlaneseq
  %v1469 = vshrl.u32 %v1468, 7
  %v1470 = vsub.s32 %v1467, %v1469
  %v1471 = vrot.slane %v1457, %v1470
  %v1472 = vcombine.low %v1464, %v1471
  %v1473 = vcombine.high %v1464, %v1471
  %v1474 = vcombine.low %v1381, %v1389
  %v1475 = vcombine.low %v1397, %v1405
  %v1477 = vunpack.c.l.s4 1983009808
  %v1478 = vunpack.c.0.s8 %v1477
  %v1479 = vlaneseq
  %v1480 = vshrl.u32 %v1479, 7
  %v1481 = vsub.s32 %v1478, %v1480
  %v1482 = vrot.slane %v1474, %v1481
  %v1484 = vunpack.c.l.s4 1983009808
  %v1485 = vunpack.c.0.s8 %v1484
  %v1486 = vlaneseq
  %v1487 = vshrl.u32 %v1486, 7
  %v1488 = vsub.s32 %v1485, %v1487
  %v1489 = vrot.slane %v1475, %v1488
  %v1490 = vcombine.low %v1482, %v1489
  %v1491 = vcombine.high %v1482, %v1489
  %v1492 = vcombine.low %v1413, %v1421
  %v1493 = vcombine.low %v1429, %v1437
  %v1495 = vunpack.c.l.s4 1983009808
  %v1496 = vunpack.c.0.s8 %v1495
  %v1497 = vlaneseq
  %v1498 = vshrl.u32 %v1497, 7
  %v1499 = vsub.s32 %v1496, %v1498
  %v1500 = vrot.slane %v1492, %v1499
  %v1502 = vunpack.c.l.s4 1983009808
  %v1503 = vunpack.c.0.s8 %v1502
  %v1504 = vlaneseq
  %v1505 = vshrl.u32 %v1504, 7
  %v1506 = vsub.s32 %v1503, %v1505
  %v1507 = vrot.slane %v1493, %v1506
  %v1508 = vcombine.low %v1500, %v1507
  %v1509 = vcombine.high %v1500, %v1507
  %1510 = vrot.lane.b32.xlu0 %v1454, 64
  %v1511 = vpop.permute.xlu0 %1510
  %1512 = vrot.lane.b32.xlu0 %v1455, 64
  %v1513 = vpop.permute.xlu0 %1512
  %1514 = vrot.lane.b32.xlu0 %v1472, 64
  %v1515 = vpop.permute.xlu0 %1514
  %1516 = vrot.lane.b32.xlu0 %v1473, 64
  %v1517 = vpop.permute.xlu0 %1516
  %1518 = vrot.lane.b32.xlu0 %v1490, 64
  %v1519 = vpop.permute.xlu0 %1518
  %1520 = vrot.lane.b32.xlu0 %v1491, 64
  %v1521 = vpop.permute.xlu0 %1520
  %1522 = vrot.lane.b32.xlu0 %v1508, 64
  %v1523 = vpop.permute.xlu0 %1522
  %1524 = vrot.lane.b32.xlu0 %v1509, 64
  %v1525 = vpop.permute.xlu0 %1524
  %v1526 = vsel %vm219, %v1511, %v1513
  %v1527 = vsel %vm219, %v1515, %v1517
  %v1528 = vsel %vm219, %v1519, %v1521
  %v1529 = vsel %vm219, %v1523, %v1525
  %v1534 = vadd.f32 %v729, %v1526
  %v1535 = vadd.f32 %v730, %v1527
  %v1536 = vadd.f32 %v731, %v1528
  %v1537 = vadd.f32 %v732, %v1529
  %v1538 = vld [vmem:[%s6] sm:$0x1]
  %v1539 = vld [vmem:[%s7] sm:$0x1]
  %v1540 = vadd.f32 %v1534, %v1535
  %v1541 = vadd.f32 %v1540, %v1536
  %v1542 = vadd.f32 %v1541, %v1537
  %v1543 = vrot.slane %v1542, 4
  %v1544 = vadd.f32 %v1542, %v1543
  %v1545 = vrot.slane %v1544, 2
  %v1546 = vadd.f32 %v1544, %v1545
  %v1547 = vrot.slane %v1546, 1
  %v1548 = vadd.f32 %v1546, %v1547
  %1550 = vrot.lane.b32.xlu0 %v1548, 120
  %v1551 = vpop.permute.xlu0 %1550
  %v1553 = vadd.f32 %v1548, %v1551
  %1554 = vrot.lane.b32.xlu0 %v1548, 112
  %v1555 = vpop.permute.xlu0 %1554
  %v1557 = vadd.f32 %v1553, %v1555
  %1558 = vrot.lane.b32.xlu0 %v1548, 104
  %v1559 = vpop.permute.xlu0 %1558
  %v1561 = vadd.f32 %v1557, %v1559
  %1562 = vrot.lane.b32.xlu0 %v1548, 96
  %v1563 = vpop.permute.xlu0 %1562
  %v1565 = vadd.f32 %v1561, %v1563
  %1566 = vrot.lane.b32.xlu0 %v1548, 88
  %v1567 = vpop.permute.xlu0 %1566
  %v1569 = vadd.f32 %v1565, %v1567
  %1570 = vrot.lane.b32.xlu0 %v1548, 80
  %v1571 = vpop.permute.xlu0 %1570
  %v1573 = vadd.f32 %v1569, %v1571
  %1574 = vrot.lane.b32.xlu0 %v1548, 72
  %v1575 = vpop.permute.xlu0 %1574
  %v1577 = vadd.f32 %v1573, %v1575
  %1578 = vrot.lane.b32.xlu0 %v1548, 64
  %v1579 = vpop.permute.xlu0 %1578
  %v1581 = vadd.f32 %v1577, %v1579
  %1582 = vrot.lane.b32.xlu0 %v1548, 56
  %v1583 = vpop.permute.xlu0 %1582
  %v1585 = vadd.f32 %v1581, %v1583
  %1586 = vrot.lane.b32.xlu0 %v1548, 48
  %v1587 = vpop.permute.xlu0 %1586
  %v1589 = vadd.f32 %v1585, %v1587
  %1590 = vrot.lane.b32.xlu0 %v1548, 40
  %v1591 = vpop.permute.xlu0 %1590
  %v1593 = vadd.f32 %v1589, %v1591
  %1594 = vrot.lane.b32.xlu0 %v1548, 32
  %v1595 = vpop.permute.xlu0 %1594
  %v1597 = vadd.f32 %v1593, %v1595
  %1598 = vrot.lane.b32.xlu0 %v1548, 24
  %v1599 = vpop.permute.xlu0 %1598
  %v1601 = vadd.f32 %v1597, %v1599
  %1602 = vrot.lane.b32.xlu0 %v1548, 16
  %v1603 = vpop.permute.xlu0 %1602
  %v1605 = vadd.f32 %v1601, %v1603
  %1606 = vrot.lane.b32.xlu0 %v1548, 8
  %v1607 = vpop.permute.xlu0 %1606
  %v1609 = vadd.f32 %v1605, %v1607
  %v1610 = vmul.f32 %v1609, 0.001953125
  %1612 = vrot.lane.b32.xlu0 %v1610, 8
  %v1613 = vpop.permute.xlu0 %1612
  %1615 = vrot.lane.b32.xlu0 %v1610, 16
  %v1616 = vpop.permute.xlu0 %1615
  %1618 = vrot.lane.b32.xlu0 %v1610, 24
  %v1619 = vpop.permute.xlu0 %1618
  %1621 = vrot.lane.b32.xlu0 %v1610, 32
  %v1622 = vpop.permute.xlu0 %1621
  %1624 = vrot.lane.b32.xlu0 %v1610, 40
  %v1625 = vpop.permute.xlu0 %1624
  %1627 = vrot.lane.b32.xlu0 %v1610, 48
  %v1628 = vpop.permute.xlu0 %1627
  %1630 = vrot.lane.b32.xlu0 %v1610, 56
  %v1631 = vpop.permute.xlu0 %1630
  %1633 = vrot.lane.b32.xlu0 %v1610, 64
  %v1634 = vpop.permute.xlu0 %1633
  %1636 = vrot.lane.b32.xlu0 %v1610, 72
  %v1637 = vpop.permute.xlu0 %1636
  %1639 = vrot.lane.b32.xlu0 %v1610, 80
  %v1640 = vpop.permute.xlu0 %1639
  %1642 = vrot.lane.b32.xlu0 %v1610, 88
  %v1643 = vpop.permute.xlu0 %1642
  %1645 = vrot.lane.b32.xlu0 %v1610, 96
  %v1646 = vpop.permute.xlu0 %1645
  %1648 = vrot.lane.b32.xlu0 %v1610, 104
  %v1649 = vpop.permute.xlu0 %1648
  %1651 = vrot.lane.b32.xlu0 %v1610, 112
  %v1652 = vpop.permute.xlu0 %1651
  %1654 = vrot.lane.b32.xlu0 %v1610, 120
  %v1655 = vpop.permute.xlu0 %1654
  %vm1657 = vcmask 64512
  %v1658 = vsel %vm1657, %v1610, %v1613
  %vm1659 = vcmask 130048
  %v1660 = vsel %vm1659, %v1658, %v1616
  %vm1661 = vcmask 195584
  %v1662 = vsel %vm1661, %v1660, %v1619
  %v1663 = vsel %vm141, %v1662, %v1622
  %vm1664 = vcmask 326656
  %v1665 = vsel %vm1664, %v1663, %v1625
  %vm1666 = vcmask 392192
  %v1667 = vsel %vm1666, %v1665, %v1628
  %vm1668 = vcmask 457728
  %v1669 = vsel %vm1668, %v1667, %v1631
  %v1670 = vsel %vm219, %v1669, %v1634
  %vm1671 = vcmask 588800
  %v1672 = vsel %vm1671, %v1670, %v1637
  %vm1673 = vcmask 654336
  %v1674 = vsel %vm1673, %v1672, %v1640
  %vm1675 = vcmask 719872
  %v1676 = vsel %vm1675, %v1674, %v1643
  %vm1677 = vcmask 785408
  %v1678 = vsel %vm1677, %v1676, %v1646
  %vm1679 = vcmask 850944
  %v1680 = vsel %vm1679, %v1678, %v1649
  %vm1681 = vcmask 916480
  %v1682 = vsel %vm1681, %v1680, %v1652
  %vm1683 = vcmask 982016
  %v1684 = vsel %vm1683, %v1682, %v1655
  %v1685 = vlaneseq
  %v1686 = vshrl.u32 %v1685, 7
  %v1687 = vsub.s32 0, %v1686
  %v1688 = vrot.slane %v1684, %v1687
  %v1689 = vsub.f32 %v1534, %v1688
  %v1690 = vsub.f32 %v1535, %v1688
  %v1691 = vsub.f32 %v1536, %v1688
  %v1692 = vsub.f32 %v1537, %v1688
  %v1693 = vmul.f32 %v1689, %v1689
  %v1694 = vmul.f32 %v1690, %v1690
  %v1695 = vmul.f32 %v1691, %v1691
  %v1696 = vmul.f32 %v1692, %v1692
  %v1697 = vadd.f32 %v1693, %v1694
  %v1698 = vadd.f32 %v1697, %v1695
  %v1699 = vadd.f32 %v1698, %v1696
  %v1700 = vrot.slane %v1699, 4
  %v1701 = vadd.f32 %v1699, %v1700
  %v1702 = vrot.slane %v1701, 2
  %v1703 = vadd.f32 %v1701, %v1702
  %v1704 = vrot.slane %v1703, 1
  %v1705 = vadd.f32 %v1703, %v1704
  %1707 = vrot.lane.b32.xlu0 %v1705, 120
  %v1708 = vpop.permute.xlu0 %1707
  %v1710 = vadd.f32 %v1705, %v1708
  %1711 = vrot.lane.b32.xlu0 %v1705, 112
  %v1712 = vpop.permute.xlu0 %1711
  %v1714 = vadd.f32 %v1710, %v1712
  %1715 = vrot.lane.b32.xlu0 %v1705, 104
  %v1716 = vpop.permute.xlu0 %1715
  %v1718 = vadd.f32 %v1714, %v1716
  %1719 = vrot.lane.b32.xlu0 %v1705, 96
  %v1720 = vpop.permute.xlu0 %1719
  %v1722 = vadd.f32 %v1718, %v1720
  %1723 = vrot.lane.b32.xlu0 %v1705, 88
  %v1724 = vpop.permute.xlu0 %1723
  %v1726 = vadd.f32 %v1722, %v1724
  %1727 = vrot.lane.b32.xlu0 %v1705, 80
  %v1728 = vpop.permute.xlu0 %1727
  %v1730 = vadd.f32 %v1726, %v1728
  %1731 = vrot.lane.b32.xlu0 %v1705, 72
  %v1732 = vpop.permute.xlu0 %1731
  %v1734 = vadd.f32 %v1730, %v1732
  %1735 = vrot.lane.b32.xlu0 %v1705, 64
  %v1736 = vpop.permute.xlu0 %1735
  %v1738 = vadd.f32 %v1734, %v1736
  %1739 = vrot.lane.b32.xlu0 %v1705, 56
  %v1740 = vpop.permute.xlu0 %1739
  %v1742 = vadd.f32 %v1738, %v1740
  %1743 = vrot.lane.b32.xlu0 %v1705, 48
  %v1744 = vpop.permute.xlu0 %1743
  %v1746 = vadd.f32 %v1742, %v1744
  %1747 = vrot.lane.b32.xlu0 %v1705, 40
  %v1748 = vpop.permute.xlu0 %1747
  %v1750 = vadd.f32 %v1746, %v1748
  %1751 = vrot.lane.b32.xlu0 %v1705, 32
  %v1752 = vpop.permute.xlu0 %1751
  %v1754 = vadd.f32 %v1750, %v1752
  %1755 = vrot.lane.b32.xlu0 %v1705, 24
  %v1756 = vpop.permute.xlu0 %1755
  %v1758 = vadd.f32 %v1754, %v1756
  %1759 = vrot.lane.b32.xlu0 %v1705, 16
  %v1760 = vpop.permute.xlu0 %1759
  %v1762 = vadd.f32 %v1758, %v1760
  %1763 = vrot.lane.b32.xlu0 %v1705, 8
  %v1764 = vpop.permute.xlu0 %1763
  %v1766 = vadd.f32 %v1762, %v1764
  %v1767 = vmul.f32 %v1766, 0.001953125
  %v1768 = vadd.f32 %v1767, 1e-05
  %v1769 = vrsqrt.pop %v1768
  %1771 = vrot.lane.b32.xlu0 %v1769, 8
  %v1772 = vpop.permute.xlu0 %1771
  %1774 = vrot.lane.b32.xlu0 %v1769, 16
  %v1775 = vpop.permute.xlu0 %1774
  %1777 = vrot.lane.b32.xlu0 %v1769, 24
  %v1778 = vpop.permute.xlu0 %1777
  %1780 = vrot.lane.b32.xlu0 %v1769, 32
  %v1781 = vpop.permute.xlu0 %1780
  %1783 = vrot.lane.b32.xlu0 %v1769, 40
  %v1784 = vpop.permute.xlu0 %1783
  %1786 = vrot.lane.b32.xlu0 %v1769, 48
  %v1787 = vpop.permute.xlu0 %1786
  %1789 = vrot.lane.b32.xlu0 %v1769, 56
  %v1790 = vpop.permute.xlu0 %1789
  %1792 = vrot.lane.b32.xlu0 %v1769, 64
  %v1793 = vpop.permute.xlu0 %1792
  %1795 = vrot.lane.b32.xlu0 %v1769, 72
  %v1796 = vpop.permute.xlu0 %1795
  %1798 = vrot.lane.b32.xlu0 %v1769, 80
  %v1799 = vpop.permute.xlu0 %1798
  %1801 = vrot.lane.b32.xlu0 %v1769, 88
  %v1802 = vpop.permute.xlu0 %1801
  %1804 = vrot.lane.b32.xlu0 %v1769, 96
  %v1805 = vpop.permute.xlu0 %1804
  %1807 = vrot.lane.b32.xlu0 %v1769, 104
  %v1808 = vpop.permute.xlu0 %1807
  %1810 = vrot.lane.b32.xlu0 %v1769, 112
  %v1811 = vpop.permute.xlu0 %1810
  %1813 = vrot.lane.b32.xlu0 %v1769, 120
  %v1814 = vpop.permute.xlu0 %1813
  %v1816 = vsel %vm1657, %v1769, %v1772
  %v1817 = vsel %vm1659, %v1816, %v1775
  %v1818 = vsel %vm1661, %v1817, %v1778
  %v1819 = vsel %vm141, %v1818, %v1781
  %v1820 = vsel %vm1664, %v1819, %v1784
  %v1821 = vsel %vm1666, %v1820, %v1787
  %v1822 = vsel %vm1668, %v1821, %v1790
  %v1823 = vsel %vm219, %v1822, %v1793
  %v1824 = vsel %vm1671, %v1823, %v1796
  %v1825 = vsel %vm1673, %v1824, %v1799
  %v1826 = vsel %vm1675, %v1825, %v1802
  %v1827 = vsel %vm1677, %v1826, %v1805
  %v1828 = vsel %vm1679, %v1827, %v1808
  %v1829 = vsel %vm1681, %v1828, %v1811
  %v1830 = vsel %vm1683, %v1829, %v1814
  %v1831 = vmul.f32 %v1830, %v1538
  %v1832 = vlaneseq
  %v1833 = vshrl.u32 %v1832, 7
  %v1834 = vsub.s32 0, %v1833
  %v1835 = vrot.slane %v1831, %v1834
  %v1836 = vmul.f32 %v1689, %v1835
  %v1837 = vmul.f32 %v1690, %v1835
  %v1838 = vmul.f32 %v1691, %v1835
  %v1839 = vmul.f32 %v1692, %v1835
  %v1841 = vlaneseq
  %v1842 = vshrl.u32 %v1841, 7
  %v1843 = vsub.s32 0, %v1842
  %v1844 = vrot.slane %v1539, %v1843
  %v1846 = vadd.f32 %v1836, %v1844
  %v1847 = vadd.f32 %v1837, %v1844
  %v1848 = vadd.f32 %v1838, %v1844
  %v1849 = vadd.f32 %v1839, %v1844
  %v1850 = vmax.f32 %v1846, 0.0
  %v1851 = vmax.f32 %v1847, 0.0
  %v1852 = vmax.f32 %v1848, 0.0
  %v1853 = vmax.f32 %v1849, 0.0
  %1854 = vst [vmem:[%s10] sm:$0xff] %v1850
  %1855 = vst [vmem:[%s10 + $0x8] sm:$0xff] %v1851
  %1856 = vst [vmem:[%s10 + $0x10] sm:$0xff] %v1852
  %1857 = vst [vmem:[%s10 + $0x18] sm:$0xff] %v1853
  %v1858 = vld [vmem:[%s8] sm:$0x1]
  %v1859 = vld [vmem:[%s9] sm:$0x1]
  %v1860 = vsel %vm219, %v1074, 0.0
  %v1861 = vsel %vm219, %v1076, 0.0
  %v1862 = vadd.f32 %v1860, %v1861
  %v1863 = vrot.slane %v1862, 4
  %v1864 = vadd.f32 %v1862, %v1863
  %v1865 = vrot.slane %v1864, 2
  %v1866 = vadd.f32 %v1864, %v1865
  %v1867 = vrot.slane %v1866, 1
  %v1868 = vadd.f32 %v1866, %v1867
  %1870 = vrot.lane.b32.xlu0 %v1868, 120
  %v1871 = vpop.permute.xlu0 %1870
  %v1873 = vadd.f32 %v1868, %v1871
  %1874 = vrot.lane.b32.xlu0 %v1868, 112
  %v1875 = vpop.permute.xlu0 %1874
  %v1877 = vadd.f32 %v1873, %v1875
  %1878 = vrot.lane.b32.xlu0 %v1868, 104
  %v1879 = vpop.permute.xlu0 %1878
  %v1881 = vadd.f32 %v1877, %v1879
  %1882 = vrot.lane.b32.xlu0 %v1868, 96
  %v1883 = vpop.permute.xlu0 %1882
  %v1885 = vadd.f32 %v1881, %v1883
  %1886 = vrot.lane.b32.xlu0 %v1868, 88
  %v1887 = vpop.permute.xlu0 %1886
  %v1889 = vadd.f32 %v1885, %v1887
  %1890 = vrot.lane.b32.xlu0 %v1868, 80
  %v1891 = vpop.permute.xlu0 %1890
  %v1893 = vadd.f32 %v1889, %v1891
  %1894 = vrot.lane.b32.xlu0 %v1868, 72
  %v1895 = vpop.permute.xlu0 %1894
  %v1897 = vadd.f32 %v1893, %v1895
  %v1898 = vmul.f32 %v1897, 0.0078125
  %1900 = vrot.lane.b32.xlu0 %v1898, 8
  %v1901 = vpop.permute.xlu0 %1900
  %1903 = vrot.lane.b32.xlu0 %v1898, 16
  %v1904 = vpop.permute.xlu0 %1903
  %1906 = vrot.lane.b32.xlu0 %v1898, 24
  %v1907 = vpop.permute.xlu0 %1906
  %1909 = vrot.lane.b32.xlu0 %v1898, 32
  %v1910 = vpop.permute.xlu0 %1909
  %1912 = vrot.lane.b32.xlu0 %v1898, 40
  %v1913 = vpop.permute.xlu0 %1912
  %1915 = vrot.lane.b32.xlu0 %v1898, 48
  %v1916 = vpop.permute.xlu0 %1915
  %1918 = vrot.lane.b32.xlu0 %v1898, 56
  %v1919 = vpop.permute.xlu0 %1918
  %v1921 = vsel %vm1657, %v1898, %v1901
  %v1922 = vsel %vm1659, %v1921, %v1904
  %v1923 = vsel %vm1661, %v1922, %v1907
  %v1924 = vsel %vm141, %v1923, %v1910
  %v1925 = vsel %vm1664, %v1924, %v1913
  %v1926 = vsel %vm1666, %v1925, %v1916
  %v1927 = vsel %vm1668, %v1926, %v1919
  %v1928 = vlaneseq
  %v1929 = vshrl.u32 %v1928, 7
  %v1930 = vsub.s32 0, %v1929
  %v1931 = vrot.slane %v1927, %v1930
  %v1932 = vsub.f32 %v1074, %v1931
  %v1933 = vsub.f32 %v1076, %v1931
  %v1934 = vmul.f32 %v1932, %v1932
  %v1935 = vmul.f32 %v1933, %v1933
  %v1936 = vsel %vm219, %v1934, 0.0
  %v1937 = vsel %vm219, %v1935, 0.0
  %v1938 = vadd.f32 %v1936, %v1937
  %v1939 = vrot.slane %v1938, 4
  %v1940 = vadd.f32 %v1938, %v1939
  %v1941 = vrot.slane %v1940, 2
  %v1942 = vadd.f32 %v1940, %v1941
  %v1943 = vrot.slane %v1942, 1
  %v1944 = vadd.f32 %v1942, %v1943
  %1946 = vrot.lane.b32.xlu0 %v1944, 120
  %v1947 = vpop.permute.xlu0 %1946
  %v1949 = vadd.f32 %v1944, %v1947
  %1950 = vrot.lane.b32.xlu0 %v1944, 112
  %v1951 = vpop.permute.xlu0 %1950
  %v1953 = vadd.f32 %v1949, %v1951
  %1954 = vrot.lane.b32.xlu0 %v1944, 104
  %v1955 = vpop.permute.xlu0 %1954
  %v1957 = vadd.f32 %v1953, %v1955
  %1958 = vrot.lane.b32.xlu0 %v1944, 96
  %v1959 = vpop.permute.xlu0 %1958
  %v1961 = vadd.f32 %v1957, %v1959
  %1962 = vrot.lane.b32.xlu0 %v1944, 88
  %v1963 = vpop.permute.xlu0 %1962
  %v1965 = vadd.f32 %v1961, %v1963
  %1966 = vrot.lane.b32.xlu0 %v1944, 80
  %v1967 = vpop.permute.xlu0 %1966
  %v1969 = vadd.f32 %v1965, %v1967
  %1970 = vrot.lane.b32.xlu0 %v1944, 72
  %v1971 = vpop.permute.xlu0 %1970
  %v1973 = vadd.f32 %v1969, %v1971
  %v1974 = vmul.f32 %v1973, 0.0078125
  %v1975 = vadd.f32 %v1974, 1e-05
  %v1976 = vrsqrt.pop %v1975
  %1978 = vrot.lane.b32.xlu0 %v1976, 8
  %v1979 = vpop.permute.xlu0 %1978
  %1981 = vrot.lane.b32.xlu0 %v1976, 16
  %v1982 = vpop.permute.xlu0 %1981
  %1984 = vrot.lane.b32.xlu0 %v1976, 24
  %v1985 = vpop.permute.xlu0 %1984
  %1987 = vrot.lane.b32.xlu0 %v1976, 32
  %v1988 = vpop.permute.xlu0 %1987
  %1990 = vrot.lane.b32.xlu0 %v1976, 40
  %v1991 = vpop.permute.xlu0 %1990
  %1993 = vrot.lane.b32.xlu0 %v1976, 48
  %v1994 = vpop.permute.xlu0 %1993
  %1996 = vrot.lane.b32.xlu0 %v1976, 56
  %v1997 = vpop.permute.xlu0 %1996
  %v1999 = vsel %vm1657, %v1976, %v1979
  %v2000 = vsel %vm1659, %v1999, %v1982
  %v2001 = vsel %vm1661, %v2000, %v1985
  %v2002 = vsel %vm141, %v2001, %v1988
  %v2003 = vsel %vm1664, %v2002, %v1991
  %v2004 = vsel %vm1666, %v2003, %v1994
  %v2005 = vsel %vm1668, %v2004, %v1997
  %v2006 = vmul.f32 %v2005, %v1858
  %v2007 = vlaneseq
  %v2008 = vshrl.u32 %v2007, 7
  %v2009 = vsub.s32 0, %v2008
  %v2010 = vrot.slane %v2006, %v2009
  %v2011 = vmul.f32 %v1932, %v2010
  %v2012 = vmul.f32 %v1933, %v2010
  %v2014 = vlaneseq
  %v2015 = vshrl.u32 %v2014, 7
  %v2016 = vsub.s32 0, %v2015
  %v2017 = vrot.slane %v1859, %v2016
  %v2019 = vadd.f32 %v2011, %v2017
  %v2020 = vadd.f32 %v2012, %v2017
  %v2021 = vmax.f32 %v2019, 0.0
  %v2022 = vmax.f32 %v2020, 0.0
  %2023 = vst.msk [vmem:[%s11] sm:$0xff] %vm219, %v2021
  %2024 = vst.msk [vmem:[%s11 + $0x8] sm:$0xff] %vm219, %v2022
  // Predicated region
  $region42: #{oct_conv_bn_act.1} parent=0 // pred_check
    _
  $region43: #{oct_conv_bn_act.1} parent=0 // pred_check_branch
    %2026 = sbr.rel (0) target = $region45
  $region44: #{oct_conv_bn_act.1} parent=0 // pred_region
    _
  $region45: #{oct_conv_bn_act.1} parent=0 // pred_fallthru
    _
  // Predicated region
  $region46: #{oct_conv_bn_act.1} parent=0 // pred_check
    _
  $region47: #{oct_conv_bn_act.1} parent=0 // pred_check_branch
    %2028 = sbr.rel (0) target = $region49
  $region48: #{oct_conv_bn_act.1} parent=0 // pred_region
    _
  $region49: #{oct_conv_bn_act.1} parent=0 // pred_fallthru
    _
  // Predicated region
  $region50: #{oct_conv_bn_act.1} parent=0 // pred_check
    _
  $region51: #{oct_conv_bn_act.1} parent=0 // pred_check_branch
    %2030 = sbr.rel (0) target = $region53
  $region52: #{oct_conv_bn_act.1} parent=0 // pred_region
    _
  $region53: #{oct_conv_bn_act.1} parent=0 // pred_fallthru
    _
  // Predicated region
  $region54: #{oct_conv_bn_act.1} parent=0 // pred_check
    _
  $region55: #{oct_conv_bn_act.1} parent=0 // pred_check_branch
    %2032 = sbr.rel (0) target = $region57
  $region56: #{oct_conv_bn_act.1} parent=0 // pred_region
    _
  $region57: #{oct_conv_bn_act.1} parent=0 // pred_fallthru
    _

</llo_original>
